<compile_context>
chip_gen: v7x
topology: tpu7x:2x2x1
jax: 0.10.0
libtpu: 0.0.40
codegen_flags: <defaults>
</compile_context>

<pallas_src>
import functools

import jax
import jax.numpy as jnp
from jax.experimental import pallas as pl
from jax.experimental.pallas import tpu as pltpu


# ---------------------------------------------------------------------------
# Pallas kernel: one (batch, T-tile) grid step, activations (H, T_TILE).
# ---------------------------------------------------------------------------
def texture_field_kernel(n_blocks, hidden, dim,
                         p_ref, zc_ref,
                         wp_ref, bp_ref,
                         wzc_ref, bzc_ref,
                         w0_ref, b0_ref, w1_ref, b1_ref,
                         wo_ref, bo_ref,
                         out_ref):
    H = hidden

    p = p_ref[0]                      # (dim, T_TILE) f32, points on the lane axis
    wp = wp_ref[...]                  # (H, dim) f32
    bp = bp_ref[...]                  # (H, 1) f32

    # fc_p as `dim` broadcast FMAs on the VPU: a K=3 matmul would be padded to
    # the full MXU systolic depth, so we keep it off the MXU entirely.
    net = bp + wp[:, 0:1] * p[0:1, :]
    for d in range(1, dim):
        net = net + wp[:, d:d + 1] * p[d:d + 1, :]            # (H, T_TILE) f32

    # Per-batch conditioning: all fc_z[n]/fc_c[n] fused into one tiny matmul on
    # this batch's code column -> (n_blocks*H, 1), lane-broadcast below.
    cond = jnp.dot(wzc_ref[...], zc_ref[0],
                   preferred_element_type=jnp.float32) + bzc_ref[...]

    # n_blocks is small -> static unroll is fine.
    # TODO(synk): switch to lax.fori_loop(..., unroll=True) with pl.ds slices of
    # the flat weight stacks if n_blocks grows (bound live ranges / spills).
    for n in range(n_blocks):
        lo, hi = n * H, (n + 1) * H
        net = net + cond[lo:hi, :]                            # (H,1) lane-broadcast add
        # ResnetBlockFC (size_in == size_out == H -> identity shortcut)
        h = jnp.maximum(net, 0.0)
        h = jnp.dot(w0_ref[lo:hi, :], h.astype(w0_ref.dtype),
                    preferred_element_type=jnp.float32) + b0_ref[lo:hi, :]
        h = jnp.maximum(h, 0.0)
        dx = jnp.dot(w1_ref[lo:hi, :], h.astype(w1_ref.dtype),
                     preferred_element_type=jnp.float32) + b1_ref[lo:hi, :]
        net = net + dx

    # fc_out(relu(net)) -- no sigmoid / normalization.  Output rows padded to 8
    # so this is a full, unmasked (8, T_TILE) sublane-tile store.
    h = jnp.maximum(net, 0.0)
    out_ref[0] = (jnp.dot(wo_ref[...], h.astype(wo_ref.dtype),
                          preferred_element_type=jnp.float32)
                  + bo_ref[...]).astype(out_ref.dtype)


# ---------------------------------------------------------------------------
# Wrapper: layout plumbing, weight packing, grid setup.
# ---------------------------------------------------------------------------
def _pick_t_tile(T, max_tile=2048):
    """Largest tile (pref. a multiple of 128) that divides T, capped for VMEM."""
    if T <= max_tile:
        return T
    cand = max_tile - (max_tile % 128)
    while cand >= 128:
        if T % cand == 0:
            return cand
        cand -= 128
    return T


def texture_field_forward(params, p, z, c, *, n_blocks, hidden):
    B, T, dim = p.shape
    H = hidden
    bf16 = jnp.bfloat16

    # --- fuse fc_z[n] / fc_c[n] into one (nb*H, Zc) weight + per-batch code.
    #     Handles the z=None / c=None branches of the PyTorch forward by simply
    #     dropping the corresponding part of the fused weight.
    w_parts, code_parts = [], []
    bzc = jnp.zeros((n_blocks, H), jnp.float32)
    if z is not None and params.get('wz') is not None:
        w_parts.append(params['wz']); code_parts.append(z); bzc = bzc + params['bz']
    if c is not None and params.get('wc') is not None:
        w_parts.append(params['wc']); code_parts.append(c); bzc = bzc + params['bc']
    if code_parts:
        zc = jnp.concatenate(code_parts, axis=-1)                      # (B, Zc)
        wzc = jnp.concatenate(w_parts, axis=-1).reshape(n_blocks * H, -1)
    else:  # no conditioning at all: zero weights on a dummy code
        zc = jnp.zeros((B, 8), jnp.float32)
        wzc = jnp.zeros((n_blocks * H, 8), jnp.float32)
    Zc = zc.shape[-1]
    bzc = bzc.reshape(n_blocks * H, 1)

    # --- layout plumbing (free XLA work): points on the lane axis, per-batch
    #     code column, flat tile-aligned weight stacks, MXU operands in bf16.
    p_t = p.transpose(0, 2, 1)                                         # (B, dim, T)
    zc_t = zc.astype(bf16).reshape(B, Zc, 1)                           # (B, Zc, 1)
    wzc = wzc.astype(bf16)
    w0 = params['w0'].reshape(n_blocks * H, H).astype(bf16)
    b0 = params['b0'].reshape(n_blocks * H, 1)
    w1 = params['w1'].reshape(n_blocks * H, H).astype(bf16)
    b1 = params['b1'].reshape(n_blocks * H, 1)
    wo = jnp.zeros((8, H), jnp.float32).at[:3].set(params['wo']).astype(bf16)
    bo = jnp.zeros((8, 1), jnp.float32).at[:3].set(params['bo'])

    args = (p_t, zc_t, params['wp'], params['bp'], wzc, bzc,
            w0, b0, w1, b1, wo, bo)

    t_tile = _pick_t_tile(T)
    grid = (B, T // t_tile)

    vmem = pl.BlockSpec(memory_space=pltpu.MemorySpace.VMEM)          # whole array resident
    in_specs = [
        pl.BlockSpec((1, dim, t_tile), lambda b, t: (b, 0, t)),        # p tile
        pl.BlockSpec((1, Zc, 1), lambda b, t: (b, 0, 0)),              # this batch's code
    ] + [vmem] * 10                                                    # weights / biases
    out_spec = pl.BlockSpec((1, 8, t_tile), lambda b, t: (b, 0, t))    # lane-dense slab

    N = B * T
    flops = (2 * N * (H * dim + 2 * n_blocks * H * H + 8 * H)
             + 2 * B * (T // t_tile) * n_blocks * H * Zc)
    bytes_accessed = int(sum(int(a.size) * a.dtype.itemsize for a in args)
                         + B * 8 * T * 4)

    kernel = functools.partial(texture_field_kernel, n_blocks, H, dim)
    out_p = pl.pallas_call(
        kernel,
        out_shape=jax.ShapeDtypeStruct((B, 8, T), jnp.float32),
        grid=grid,
        in_specs=in_specs,
        out_specs=out_spec,
        compiler_params=pltpu.CompilerParams(
            dimension_semantics=("parallel", "parallel")),
        cost_estimate=pl.CostEstimate(flops=flops, transcendentals=0,
                                      bytes_accessed=bytes_accessed),
    )(*args)

    # TODO(synk): for production sizes (very large T or hidden >= 128) derive
    # t_tile from v7x's 64 MiB VMEM budget and raise
    # pltpu.CompilerParams(vmem_limit_bytes=...) accordingly.
    return out_p[:, :3, :].transpose(0, 2, 1)                          # (B, T, 3)


# ---------------------------------------------------------------------------
# Pure-JAX reference (PyTorch-style channels-last math) for correctness check.
# ---------------------------------------------------------------------------
def texture_field_ref(params, p, z, c, n_blocks):
    net = p @ params['wp'].T + params['bp'][:, 0]                      # (B, T, H)
    for n in range(n_blocks):
        net = net + (z @ params['wz'][n].T + params['bz'][n])[:, None, :]
        net = net + (c @ params['wc'][n].T + params['bc'][n])[:, None, :]
        h = jnp.maximum(net, 0.0)
        h = h @ params['w0'][n].T + params['b0'][n]
        h = jnp.maximum(h, 0.0)
        dx = h @ params['w1'][n].T + params['b1'][n]
        net = net + dx
    h = jnp.maximum(net, 0.0)
    return h @ params['wo'].T + params['bo'][:, 0]                     # (B, T, 3)


def init_params(key, dim, z_dim, c_dim, hidden, n_blocks):
    # Synthetic random parameters (PyTorch zero-inits fc_1.weight; random values
    # used so the residual path is actually exercised by the check).
    ks = jax.random.split(key, 12)
    f32 = jnp.float32
    s = 0.1
    return {
        'wp': s * jax.random.normal(ks[0], (hidden, dim), f32),
        'bp': s * jax.random.normal(ks[1], (hidden, 1), f32),
        'wz': s * jax.random.normal(ks[2], (n_blocks, hidden, z_dim), f32),
        'bz': s * jax.random.normal(ks[3], (n_blocks, hidden), f32),
        'wc': s * jax.random.normal(ks[4], (n_blocks, hidden, c_dim), f32),
        'bc': s * jax.random.normal(ks[5], (n_blocks, hidden), f32),
        'w0': s * jax.random.normal(ks[6], (n_blocks, hidden, hidden), f32),
        'b0': s * jax.random.normal(ks[7], (n_blocks, hidden), f32),
        'w1': s * jax.random.normal(ks[8], (n_blocks, hidden, hidden), f32),
        'b1': s * jax.random.normal(ks[9], (n_blocks, hidden), f32),
        'wo': s * jax.random.normal(ks[10], (3, hidden), f32),
        'bo': s * jax.random.normal(ks[11], (3, 1), f32),
    }


if __name__ == "__main__":
    # Small shapes consistent with the module (dim=3 points, latent z and c).
    B, T = 2, 64           # batch, number of query points
    DIM = 3                # input point dimension
    Z_DIM = 16             # latent code z dimension
    C_DIM = 16             # conditioning code c dimension
    HIDDEN = 32            # hidden size
    N_BLOCKS = 3           # number of ResnetBlockFC blocks

    key = jax.random.PRNGKey(0)
    kp, kz, kc, kparam = jax.random.split(key, 4)

    p = jax.random.uniform(kp, (B, T, DIM), jnp.float32)
    z = jax.random.normal(kz, (B, Z_DIM), jnp.float32)
    c = jax.random.normal(kc, (B, C_DIM), jnp.float32)
    params = init_params(kparam, DIM, Z_DIM, C_DIM, HIDDEN, N_BLOCKS)

    out = texture_field_forward(params, p, z, c, n_blocks=N_BLOCKS, hidden=HIDDEN)
    out = jax.block_until_ready(out)

    ref = jax.block_until_ready(texture_field_ref(params, p, z, c, N_BLOCKS))
    assert out.shape == (B, T, 3), out.shape
    max_err = float(jnp.max(jnp.abs(out - ref)))
    # bf16 MXU operands (per review) -> tolerance relaxed vs. pure-f32 math.
    assert jnp.allclose(out, ref, rtol=5e-2, atol=5e-2), max_err

    print("KERNEL_OK")
</pallas_src>

<mosaic_0001>
module attributes {stable_mosaic.version = 11 : i64} {
  func.func @texture_field_kernel(%arg0: i32, %arg1: i32, %arg2: memref<1x3x64xf32, #tpu.memory_space<vmem>>, %arg3: memref<1x32x1xbf16, #tpu.memory_space<vmem>>, %arg4: memref<32x3xf32, #tpu.memory_space<vmem>>, %arg5: memref<32x1xf32, #tpu.memory_space<vmem>>, %arg6: memref<96x32xbf16, #tpu.memory_space<vmem>>, %arg7: memref<96x1xf32, #tpu.memory_space<vmem>>, %arg8: memref<96x32xbf16, #tpu.memory_space<vmem>>, %arg9: memref<96x1xf32, #tpu.memory_space<vmem>>, %arg10: memref<96x32xbf16, #tpu.memory_space<vmem>>, %arg11: memref<96x1xf32, #tpu.memory_space<vmem>>, %arg12: memref<8x32xbf16, #tpu.memory_space<vmem>>, %arg13: memref<8x1xf32, #tpu.memory_space<vmem>>, %arg14: memref<1x8x64xf32, #tpu.memory_space<vmem>>) attributes {dimension_semantics = [#tpu.dimension_semantics<parallel>, #tpu.dimension_semantics<parallel>], iteration_bounds = array<i64: 2, 1>, scalar_prefetch = 0 : i64, scratch_operands = 0 : i64, tpu.core_type = #tpu.core_type<tc>, window_params = [{transform_indices = @transform_0, window_bounds = array<i64: 1, 3, 64>}, {transform_indices = @transform_1, window_bounds = array<i64: 1, 32, 1>}, {pipeline_mode = #tpu.pipeline_mode<synchronous>, transform_indices = @transform_2, window_bounds = array<i64: 32, 3>}, {pipeline_mode = #tpu.pipeline_mode<synchronous>, transform_indices = @transform_3, window_bounds = array<i64: 32, 1>}, {pipeline_mode = #tpu.pipeline_mode<synchronous>, transform_indices = @transform_4, window_bounds = array<i64: 96, 32>}, {pipeline_mode = #tpu.pipeline_mode<synchronous>, transform_indices = @transform_5, window_bounds = array<i64: 96, 1>}, {pipeline_mode = #tpu.pipeline_mode<synchronous>, transform_indices = @transform_6, window_bounds = array<i64: 96, 32>}, {pipeline_mode = #tpu.pipeline_mode<synchronous>, transform_indices = @transform_7, window_bounds = array<i64: 96, 1>}, {pipeline_mode = #tpu.pipeline_mode<synchronous>, transform_indices = @transform_8, window_bounds = array<i64: 96, 32>}, {pipeline_mode = #tpu.pipeline_mode<synchronous>, transform_indices = @transform_9, window_bounds = array<i64: 96, 1>}, {pipeline_mode = #tpu.pipeline_mode<synchronous>, transform_indices = @transform_10, window_bounds = array<i64: 8, 32>}, {pipeline_mode = #tpu.pipeline_mode<synchronous>, transform_indices = @transform_11, window_bounds = array<i64: 8, 1>}, {transform_indices = @transform_12, window_bounds = array<i64: 1, 8, 64>}]} {
    %c0 = arith.constant 0 : index
    %c0_0 = arith.constant 0 : index
    %c0_1 = arith.constant 0 : index
    %0 = vector.load %arg2[%c0, %c0_0, %c0_1] : memref<1x3x64xf32, #tpu.memory_space<vmem>>, vector<1x3x64xf32>
    %1 = vector.shape_cast %0 : vector<1x3x64xf32> to vector<3x64xf32>
    %c0_2 = arith.constant 0 : index
    %c0_3 = arith.constant 0 : index
    %2 = vector.load %arg4[%c0_2, %c0_3] : memref<32x3xf32, #tpu.memory_space<vmem>>, vector<32x3xf32>
    %c0_4 = arith.constant 0 : index
    %c0_5 = arith.constant 0 : index
    %3 = vector.load %arg5[%c0_4, %c0_5] : memref<32x1xf32, #tpu.memory_space<vmem>>, vector<32x1xf32>
    %4 = vector.extract_strided_slice %2 {offsets = [0, 0], sizes = [32, 1], strides = [1, 1]} : vector<32x3xf32> to vector<32x1xf32>
    %5 = vector.extract_strided_slice %1 {offsets = [0, 0], sizes = [1, 64], strides = [1, 1]} : vector<3x64xf32> to vector<1x64xf32>
    %6 = vector.broadcast %4 : vector<32x1xf32> to vector<32x64xf32>
    %7 = vector.broadcast %5 : vector<1x64xf32> to vector<32x64xf32>
    %8 = arith.mulf %6, %7 : vector<32x64xf32>
    %9 = vector.broadcast %3 : vector<32x1xf32> to vector<32x64xf32>
    %10 = arith.addf %9, %8 : vector<32x64xf32>
    %11 = vector.extract_strided_slice %2 {offsets = [0, 1], sizes = [32, 1], strides = [1, 1]} : vector<32x3xf32> to vector<32x1xf32>
    %12 = vector.extract_strided_slice %1 {offsets = [1, 0], sizes = [1, 64], strides = [1, 1]} : vector<3x64xf32> to vector<1x64xf32>
    %13 = vector.broadcast %11 : vector<32x1xf32> to vector<32x64xf32>
    %14 = vector.broadcast %12 : vector<1x64xf32> to vector<32x64xf32>
    %15 = arith.mulf %13, %14 : vector<32x64xf32>
    %16 = arith.addf %10, %15 : vector<32x64xf32>
    %17 = vector.extract_strided_slice %2 {offsets = [0, 2], sizes = [32, 1], strides = [1, 1]} : vector<32x3xf32> to vector<32x1xf32>
    %18 = vector.extract_strided_slice %1 {offsets = [2, 0], sizes = [1, 64], strides = [1, 1]} : vector<3x64xf32> to vector<1x64xf32>
    %19 = vector.broadcast %17 : vector<32x1xf32> to vector<32x64xf32>
    %20 = vector.broadcast %18 : vector<1x64xf32> to vector<32x64xf32>
    %21 = arith.mulf %19, %20 : vector<32x64xf32>
    %22 = arith.addf %16, %21 : vector<32x64xf32>
    %c0_6 = arith.constant 0 : index
    %c0_7 = arith.constant 0 : index
    %23 = vector.load %arg6[%c0_6, %c0_7] : memref<96x32xbf16, #tpu.memory_space<vmem>>, vector<96x32xbf16>
    %c0_8 = arith.constant 0 : index
    %c0_9 = arith.constant 0 : index
    %c0_10 = arith.constant 0 : index
    %24 = vector.load %arg3[%c0_8, %c0_9, %c0_10] : memref<1x32x1xbf16, #tpu.memory_space<vmem>>, vector<1x32x1xbf16>
    %25 = vector.shape_cast %24 : vector<1x32x1xbf16> to vector<32x1xbf16>
    %cst = arith.constant dense<0.000000e+00> : vector<96x1xf32>
    %26 = tpu.matmul %23, %25, %cst {dimension_numbers = #tpu.dot_dimension_numbers<[1], [0], [0], [1], [0, 0, 1, 1], [], []>} : vector<96x32xbf16>, vector<32x1xbf16>, vector<96x1xf32> -> vector<96x1xf32>
    %c0_11 = arith.constant 0 : index
    %c0_12 = arith.constant 0 : index
    %27 = vector.load %arg7[%c0_11, %c0_12] : memref<96x1xf32, #tpu.memory_space<vmem>>, vector<96x1xf32>
    %28 = arith.addf %26, %27 : vector<96x1xf32>
    %29 = vector.extract_strided_slice %28 {offsets = [0, 0], sizes = [32, 1], strides = [1, 1]} : vector<96x1xf32> to vector<32x1xf32>
    %30 = vector.broadcast %29 : vector<32x1xf32> to vector<32x64xf32>
    %31 = arith.addf %22, %30 : vector<32x64xf32>
    %cst_13 = arith.constant 0.000000e+00 : f32
    %32 = vector.broadcast %cst_13 : f32 to vector<32x64xf32>
    %33 = arith.maximumf %31, %32 : vector<32x64xf32>
    %c0_14 = arith.constant 0 : index
    %c0_15 = arith.constant 0 : index
    %34 = vector.load %arg8[%c0_14, %c0_15] : memref<96x32xbf16, #tpu.memory_space<vmem>>, vector<32x32xbf16>
    %35 = arith.truncf %33 : vector<32x64xf32> to vector<32x64xbf16>
    %cst_16 = arith.constant dense<0.000000e+00> : vector<32x64xf32>
    %36 = tpu.matmul %34, %35, %cst_16 {dimension_numbers = #tpu.dot_dimension_numbers<[1], [0], [0], [1], [0, 0, 1, 1], [], []>} : vector<32x32xbf16>, vector<32x64xbf16>, vector<32x64xf32> -> vector<32x64xf32>
    %c0_17 = arith.constant 0 : index
    %c0_18 = arith.constant 0 : index
    %37 = vector.load %arg9[%c0_17, %c0_18] : memref<96x1xf32, #tpu.memory_space<vmem>>, vector<32x1xf32>
    %38 = vector.broadcast %37 : vector<32x1xf32> to vector<32x64xf32>
    %39 = arith.addf %36, %38 : vector<32x64xf32>
    %cst_19 = arith.constant 0.000000e+00 : f32
    %40 = vector.broadcast %cst_19 : f32 to vector<32x64xf32>
    %41 = arith.maximumf %39, %40 : vector<32x64xf32>
    %c0_20 = arith.constant 0 : index
    %c0_21 = arith.constant 0 : index
    %42 = vector.load %arg10[%c0_20, %c0_21] : memref<96x32xbf16, #tpu.memory_space<vmem>>, vector<32x32xbf16>
    %43 = arith.truncf %41 : vector<32x64xf32> to vector<32x64xbf16>
    %cst_22 = arith.constant dense<0.000000e+00> : vector<32x64xf32>
    %44 = tpu.matmul %42, %43, %cst_22 {dimension_numbers = #tpu.dot_dimension_numbers<[1], [0], [0], [1], [0, 0, 1, 1], [], []>} : vector<32x32xbf16>, vector<32x64xbf16>, vector<32x64xf32> -> vector<32x64xf32>
    %c0_23 = arith.constant 0 : index
    %c0_24 = arith.constant 0 : index
    %45 = vector.load %arg11[%c0_23, %c0_24] : memref<96x1xf32, #tpu.memory_space<vmem>>, vector<32x1xf32>
    %46 = vector.broadcast %45 : vector<32x1xf32> to vector<32x64xf32>
    %47 = arith.addf %44, %46 : vector<32x64xf32>
    %48 = arith.addf %31, %47 : vector<32x64xf32>
    %49 = vector.extract_strided_slice %28 {offsets = [32, 0], sizes = [32, 1], strides = [1, 1]} : vector<96x1xf32> to vector<32x1xf32>
    %50 = vector.broadcast %49 : vector<32x1xf32> to vector<32x64xf32>
    %51 = arith.addf %48, %50 : vector<32x64xf32>
    %cst_25 = arith.constant 0.000000e+00 : f32
    %52 = vector.broadcast %cst_25 : f32 to vector<32x64xf32>
    %53 = arith.maximumf %51, %52 : vector<32x64xf32>
    %c32 = arith.constant 32 : index
    %c0_26 = arith.constant 0 : index
    %54 = vector.load %arg8[%c32, %c0_26] : memref<96x32xbf16, #tpu.memory_space<vmem>>, vector<32x32xbf16>
    %55 = arith.truncf %53 : vector<32x64xf32> to vector<32x64xbf16>
    %cst_27 = arith.constant dense<0.000000e+00> : vector<32x64xf32>
    %56 = tpu.matmul %54, %55, %cst_27 {dimension_numbers = #tpu.dot_dimension_numbers<[1], [0], [0], [1], [0, 0, 1, 1], [], []>} : vector<32x32xbf16>, vector<32x64xbf16>, vector<32x64xf32> -> vector<32x64xf32>
    %c32_28 = arith.constant 32 : index
    %c0_29 = arith.constant 0 : index
    %57 = vector.load %arg9[%c32_28, %c0_29] : memref<96x1xf32, #tpu.memory_space<vmem>>, vector<32x1xf32>
    %58 = vector.broadcast %57 : vector<32x1xf32> to vector<32x64xf32>
    %59 = arith.addf %56, %58 : vector<32x64xf32>
    %cst_30 = arith.constant 0.000000e+00 : f32
    %60 = vector.broadcast %cst_30 : f32 to vector<32x64xf32>
    %61 = arith.maximumf %59, %60 : vector<32x64xf32>
    %c32_31 = arith.constant 32 : index
    %c0_32 = arith.constant 0 : index
    %62 = vector.load %arg10[%c32_31, %c0_32] : memref<96x32xbf16, #tpu.memory_space<vmem>>, vector<32x32xbf16>
    %63 = arith.truncf %61 : vector<32x64xf32> to vector<32x64xbf16>
    %cst_33 = arith.constant dense<0.000000e+00> : vector<32x64xf32>
    %64 = tpu.matmul %62, %63, %cst_33 {dimension_numbers = #tpu.dot_dimension_numbers<[1], [0], [0], [1], [0, 0, 1, 1], [], []>} : vector<32x32xbf16>, vector<32x64xbf16>, vector<32x64xf32> -> vector<32x64xf32>
    %c32_34 = arith.constant 32 : index
    %c0_35 = arith.constant 0 : index
    %65 = vector.load %arg11[%c32_34, %c0_35] : memref<96x1xf32, #tpu.memory_space<vmem>>, vector<32x1xf32>
    %66 = vector.broadcast %65 : vector<32x1xf32> to vector<32x64xf32>
    %67 = arith.addf %64, %66 : vector<32x64xf32>
    %68 = arith.addf %51, %67 : vector<32x64xf32>
    %69 = vector.extract_strided_slice %28 {offsets = [64, 0], sizes = [32, 1], strides = [1, 1]} : vector<96x1xf32> to vector<32x1xf32>
    %70 = vector.broadcast %69 : vector<32x1xf32> to vector<32x64xf32>
    %71 = arith.addf %68, %70 : vector<32x64xf32>
    %cst_36 = arith.constant 0.000000e+00 : f32
    %72 = vector.broadcast %cst_36 : f32 to vector<32x64xf32>
    %73 = arith.maximumf %71, %72 : vector<32x64xf32>
    %c64 = arith.constant 64 : index
    %c0_37 = arith.constant 0 : index
    %74 = vector.load %arg8[%c64, %c0_37] : memref<96x32xbf16, #tpu.memory_space<vmem>>, vector<32x32xbf16>
    %75 = arith.truncf %73 : vector<32x64xf32> to vector<32x64xbf16>
    %cst_38 = arith.constant dense<0.000000e+00> : vector<32x64xf32>
    %76 = tpu.matmul %74, %75, %cst_38 {dimension_numbers = #tpu.dot_dimension_numbers<[1], [0], [0], [1], [0, 0, 1, 1], [], []>} : vector<32x32xbf16>, vector<32x64xbf16>, vector<32x64xf32> -> vector<32x64xf32>
    %c64_39 = arith.constant 64 : index
    %c0_40 = arith.constant 0 : index
    %77 = vector.load %arg9[%c64_39, %c0_40] : memref<96x1xf32, #tpu.memory_space<vmem>>, vector<32x1xf32>
    %78 = vector.broadcast %77 : vector<32x1xf32> to vector<32x64xf32>
    %79 = arith.addf %76, %78 : vector<32x64xf32>
    %cst_41 = arith.constant 0.000000e+00 : f32
    %80 = vector.broadcast %cst_41 : f32 to vector<32x64xf32>
    %81 = arith.maximumf %79, %80 : vector<32x64xf32>
    %c64_42 = arith.constant 64 : index
    %c0_43 = arith.constant 0 : index
    %82 = vector.load %arg10[%c64_42, %c0_43] : memref<96x32xbf16, #tpu.memory_space<vmem>>, vector<32x32xbf16>
    %83 = arith.truncf %81 : vector<32x64xf32> to vector<32x64xbf16>
    %cst_44 = arith.constant dense<0.000000e+00> : vector<32x64xf32>
    %84 = tpu.matmul %82, %83, %cst_44 {dimension_numbers = #tpu.dot_dimension_numbers<[1], [0], [0], [1], [0, 0, 1, 1], [], []>} : vector<32x32xbf16>, vector<32x64xbf16>, vector<32x64xf32> -> vector<32x64xf32>
    %c64_45 = arith.constant 64 : index
    %c0_46 = arith.constant 0 : index
    %85 = vector.load %arg11[%c64_45, %c0_46] : memref<96x1xf32, #tpu.memory_space<vmem>>, vector<32x1xf32>
    %86 = vector.broadcast %85 : vector<32x1xf32> to vector<32x64xf32>
    %87 = arith.addf %84, %86 : vector<32x64xf32>
    %88 = arith.addf %71, %87 : vector<32x64xf32>
    %cst_47 = arith.constant 0.000000e+00 : f32
    %89 = vector.broadcast %cst_47 : f32 to vector<32x64xf32>
    %90 = arith.maximumf %88, %89 : vector<32x64xf32>
    %c0_48 = arith.constant 0 : index
    %c0_49 = arith.constant 0 : index
    %91 = vector.load %arg12[%c0_48, %c0_49] : memref<8x32xbf16, #tpu.memory_space<vmem>>, vector<8x32xbf16>
    %92 = arith.truncf %90 : vector<32x64xf32> to vector<32x64xbf16>
    %cst_50 = arith.constant dense<0.000000e+00> : vector<8x64xf32>
    %93 = tpu.matmul %91, %92, %cst_50 {dimension_numbers = #tpu.dot_dimension_numbers<[1], [0], [0], [1], [0, 0, 1, 1], [], []>} : vector<8x32xbf16>, vector<32x64xbf16>, vector<8x64xf32> -> vector<8x64xf32>
    %c0_51 = arith.constant 0 : index
    %c0_52 = arith.constant 0 : index
    %94 = vector.load %arg13[%c0_51, %c0_52] : memref<8x1xf32, #tpu.memory_space<vmem>>, vector<8x1xf32>
    %95 = vector.broadcast %94 : vector<8x1xf32> to vector<8x64xf32>
    %96 = arith.addf %93, %95 : vector<8x64xf32>
    %c0_53 = arith.constant 0 : index
    %c0_54 = arith.constant 0 : index
    %c0_55 = arith.constant 0 : index
    %97 = vector.load %arg14[%c0_53, %c0_54, %c0_55] : memref<1x8x64xf32, #tpu.memory_space<vmem>>, vector<1x8x64xf32>
    %98 = vector.shape_cast %97 : vector<1x8x64xf32> to vector<8x64xf32>
    %99 = vector.shape_cast %96 : vector<8x64xf32> to vector<1x8x64xf32>
    tpu.vector_store %arg14[%c0_53, %c0_54, %c0_55], %99 {strides = array<i32>} : memref<1x8x64xf32, #tpu.memory_space<vmem>>, vector<1x8x64xf32>,
    return
  }
  func.func @transform_0(%arg0: i32, %arg1: i32) -> (i32, i32, i32) {
    %c0_i32 = arith.constant 0 : i32
    %c0_i32_0 = arith.constant 0 : i32
    return %arg0, %c0_i32, %arg1 : i32, i32, i32
  }
  func.func @transform_1(%arg0: i32, %arg1: i32) -> (i32, i32, i32) {
    %c0_i32 = arith.constant 0 : i32
    %c0_i32_0 = arith.constant 0 : i32
    %c0_i32_1 = arith.constant 0 : i32
    return %arg0, %c0_i32, %c0_i32_0 : i32, i32, i32
  }
  func.func @transform_2(%arg0: i32, %arg1: i32) -> (i32, i32) {
    %c0_i32 = arith.constant 0 : i32
    %c0_i32_0 = arith.constant 0 : i32
    %c0_i32_1 = arith.constant 0 : i32
    return %c0_i32, %c0_i32_0 : i32, i32
  }
  func.func @transform_3(%arg0: i32, %arg1: i32) -> (i32, i32) {
    %c0_i32 = arith.constant 0 : i32
    %c0_i32_0 = arith.constant 0 : i32
    %c0_i32_1 = arith.constant 0 : i32
    return %c0_i32, %c0_i32_0 : i32, i32
  }
  func.func @transform_4(%arg0: i32, %arg1: i32) -> (i32, i32) {
    %c0_i32 = arith.constant 0 : i32
    %c0_i32_0 = arith.constant 0 : i32
    %c0_i32_1 = arith.constant 0 : i32
    return %c0_i32, %c0_i32_0 : i32, i32
  }
  func.func @transform_5(%arg0: i32, %arg1: i32) -> (i32, i32) {
    %c0_i32 = arith.constant 0 : i32
    %c0_i32_0 = arith.constant 0 : i32
    %c0_i32_1 = arith.constant 0 : i32
    return %c0_i32, %c0_i32_0 : i32, i32
  }
  func.func @transform_6(%arg0: i32, %arg1: i32) -> (i32, i32) {
    %c0_i32 = arith.constant 0 : i32
    %c0_i32_0 = arith.constant 0 : i32
    %c0_i32_1 = arith.constant 0 : i32
    return %c0_i32, %c0_i32_0 : i32, i32
  }
  func.func @transform_7(%arg0: i32, %arg1: i32) -> (i32, i32) {
    %c0_i32 = arith.constant 0 : i32
    %c0_i32_0 = arith.constant 0 : i32
    %c0_i32_1 = arith.constant 0 : i32
    return %c0_i32, %c0_i32_0 : i32, i32
  }
  func.func @transform_8(%arg0: i32, %arg1: i32) -> (i32, i32) {
    %c0_i32 = arith.constant 0 : i32
    %c0_i32_0 = arith.constant 0 : i32
    %c0_i32_1 = arith.constant 0 : i32
    return %c0_i32, %c0_i32_0 : i32, i32
  }
  func.func @transform_9(%arg0: i32, %arg1: i32) -> (i32, i32) {
    %c0_i32 = arith.constant 0 : i32
    %c0_i32_0 = arith.constant 0 : i32
    %c0_i32_1 = arith.constant 0 : i32
    return %c0_i32, %c0_i32_0 : i32, i32
  }
  func.func @transform_10(%arg0: i32, %arg1: i32) -> (i32, i32) {
    %c0_i32 = arith.constant 0 : i32
    %c0_i32_0 = arith.constant 0 : i32
    %c0_i32_1 = arith.constant 0 : i32
    return %c0_i32, %c0_i32_0 : i32, i32
  }
  func.func @transform_11(%arg0: i32, %arg1: i32) -> (i32, i32) {
    %c0_i32 = arith.constant 0 : i32
    %c0_i32_0 = arith.constant 0 : i32
    %c0_i32_1 = arith.constant 0 : i32
    return %c0_i32, %c0_i32_0 : i32, i32
  }
  func.func @transform_12(%arg0: i32, %arg1: i32) -> (i32, i32, i32) {
    %c0_i32 = arith.constant 0 : i32
    %c0_i32_0 = arith.constant 0 : i32
    return %arg0, %c0_i32, %arg1 : i32, i32, i32
  }
}

</mosaic_0001>

<llo_original>
// kernel: tpu_custom_call.1
$region0: #{tpu_custom_call.1}
  #allocation0 [shape = 'u32[]', space=smem, size = 0x4, offset = 0x4, fixed_abs, tag = 'smem constant byte address 0x4 - core index']
  #allocation1 [shape = 'u32[144,128]{1,0:T(1,128)}', space=vmem, size = 0x12000, scoped, tag = 'internal scratch']
  %s0 = inlined_call_operand.vmem [shape: f32[2,3,64], index: 0, kind: input, shape index: {}]
  %s1 = inlined_call_operand.vmem [shape: bf16[2,32,1], index: 1, kind: input, shape index: {}]
  %s2 = inlined_call_operand.vmem [shape: f32[32,3], index: 2, kind: input, shape index: {}]
  %s3 = inlined_call_operand.vmem [shape: f32[32,1], index: 3, kind: input, shape index: {}]
  %s4 = inlined_call_operand.vmem [shape: bf16[96,32], index: 4, kind: input, shape index: {}]
  %s5 = inlined_call_operand.vmem [shape: f32[96,1], index: 5, kind: input, shape index: {}]
  %s6 = inlined_call_operand.vmem [shape: bf16[96,32], index: 6, kind: input, shape index: {}]
  %s7 = inlined_call_operand.vmem [shape: f32[96,1], index: 7, kind: input, shape index: {}]
  %s8 = inlined_call_operand.vmem [shape: bf16[96,32], index: 8, kind: input, shape index: {}]
  %s9 = inlined_call_operand.vmem [shape: f32[96,1], index: 9, kind: input, shape index: {}]
  %s10 = inlined_call_operand.vmem [shape: bf16[8,32], index: 10, kind: input, shape index: {}]
  %s11 = inlined_call_operand.vmem [shape: f32[8,1], index: 11, kind: input, shape index: {}]
  %s12 = inlined_call_operand.hbm [shape: f32[2,8,64], index: 12, kind: output, shape index: {}]
  %s13 = sld [smem:[#allocation0]]
  $region81: #{tpu_custom_call.1} parent=0
    _
  %s15 = ssub.s32 1, %s13
  %s16 = scalar_select 0, %s15, %s13
  $region1: #{tpu_custom_call.1} parent=0
    #allocation2 [shape = 'u8[8192]{0}', space=vmem, size = 0x2000, scoped, tag = 'output window, operand 0']
    #allocation3 [shape = 's32[2]{0}', space=sflag, size = 0x8, scoped, tag = 'scoped memory for tpu_custom_call.1']
    %17 = vsyncpa [#allocation3], 0
    %s18 = scalar_lea.sflag [#allocation3], 1
    %19 = vsyncpa %s18, 0
    loop: start=0, step=1, limit=4
    $region2: #{tpu_custom_call.1} parent=1 // loop_pre_header
      _
    $region3: #{tpu_custom_call.1} parent=1 // loop_header
      %s21 = sphi 0, %s25
      %p22 = scmp.ge.s32.totalorder %s21, 4
      %s28 = sphi 0, %s40
      %s29 = sphi 0, %s36
      %s30 = sphi 0, %s28
      %s31 = sphi 0, %s29
      %s32 = sphi 0, %s30
      %s33 = sphi 0, %s31
      %s45 = sphi 0, %s47
      %s48 = sphi 0, %s45
      %s49 = sphi 0, %s48
      %s65 = sphi 0, %s49
      %s71 = sphi 0, %s73
      %s74 = sphi 0, %s71
      %s75 = sphi 0, %s74
      %s91 = sphi 0, %s75
      %s95 = sphi 0, %s95
      %s97 = sphi 0, %s95
      %s98 = sphi 0, %s97
      %s112 = sphi 0, %s98
      %s116 = sphi 0, %s116
      %s118 = sphi 0, %s116
      %s119 = sphi 0, %s118
      %s133 = sphi 0, %s119
      %s137 = sphi 0, %s137
      %s139 = sphi 0, %s137
      %s140 = sphi 0, %s139
      %s154 = sphi 0, %s140
      %s158 = sphi 0, %s158
      %s160 = sphi 0, %s158
      %s161 = sphi 0, %s160
      %s175 = sphi 0, %s161
      %s179 = sphi 0, %s179
      %s181 = sphi 0, %s179
      %s182 = sphi 0, %s181
      %s196 = sphi 0, %s182
      %s200 = sphi 0, %s200
      %s202 = sphi 0, %s200
      %s203 = sphi 0, %s202
      %s217 = sphi 0, %s203
      %s221 = sphi 0, %s221
      %s223 = sphi 0, %s221
      %s224 = sphi 0, %s223
      %s238 = sphi 0, %s224
      %s242 = sphi 0, %s242
      %s244 = sphi 0, %s242
      %s245 = sphi 0, %s244
      %s259 = sphi 0, %s245
      %s263 = sphi 0, %s263
      %s265 = sphi 0, %s263
      %s266 = sphi 0, %s265
      %s280 = sphi 0, %s266
      %s284 = sphi 0, %s284
      %s286 = sphi 0, %s284
      %s287 = sphi 0, %s286
      %s301 = sphi 0, %s287
      %s309 = sphi 0, %s311
      %s312 = sphi 0, %s309
      %s313 = sphi 0, %s312
      %s329 = sphi 0, %s313
    $region4: #{tpu_custom_call.1} parent=1 // loop_header_branch
      %24 = sbr.rel (%p22) target = $region8
    $region5: #{tpu_custom_call.1} parent=1 // loop_body
      %s26 = ssub.s32 %s21, 1
      %s27 = ssub.s32 %s21, 2
      %s34 = sadd.s32 1, %s29
      %p35 = scmp.ge.s32.totalorder %s34, 1
      %s36 = scalar_select %p35, 0, %s34
      %s37 = sadd.s32 1, %s28
      %s38 = scalar_select %p35, %s37, %s28
      %p39 = scmp.ge.s32.totalorder %s38, 2
      %s40 = scalar_select %p39, 0, %s38
      %s41 = ssub.s32 %s28, %s40
      %s42 = ssub.s32 %s29, %s36
      %s43 = sor.u32 %s41, %s42
      %p44 = scmp.eq.s32.totalorder %s43, 0
      %s46 = sadd.s32 %s45, 1
      %s47 = scalar_select %p44, %s45, %s46
      %p50 = pneg %p44
      %p51 = scmp.eq.s32.totalorder %s21, 1
      %p52 = por %p50, %p51
      %p53 = scmp.ne.s32.totalorder %s45, %s48
      %p54 = scmp.eq.s32.totalorder %s21, 0
      %p55 = por %p53, %p54
      %p56 = scmp.ne.s32.totalorder %s45, %s48
      %p57 = scmp.eq.s32.totalorder %s26, 1
      %p58 = por %p56, %p57
      %p59 = scmp.ne.s32.totalorder %s48, %s49
      %p60 = scmp.eq.s32.totalorder %s26, 0
      %p61 = por %p59, %p60
      %p62 = scmp.ne.s32.totalorder %s48, %s49
      %p63 = scmp.eq.s32.totalorder %s27, 1
      %p64 = por %p62, %p63
      %p66 = scmp.ne.s32.totalorder %s49, %s65
      %p67 = scmp.eq.s32.totalorder %s27, 0
      %p68 = por %p66, %p67
      %s69 = ssub.s32 %s28, %s40
      %p70 = scmp.eq.s32.totalorder %s69, 0
      %s72 = sadd.s32 %s71, 1
      %s73 = scalar_select %p70, %s71, %s72
      %p76 = pneg %p70
      %p77 = scmp.eq.s32.totalorder %s21, 1
      %p78 = por %p76, %p77
      %p79 = scmp.ne.s32.totalorder %s71, %s74
      %p80 = scmp.eq.s32.totalorder %s21, 0
      %p81 = por %p79, %p80
      %p82 = scmp.ne.s32.totalorder %s71, %s74
      %p83 = scmp.eq.s32.totalorder %s26, 1
      %p84 = por %p82, %p83
      %p85 = scmp.ne.s32.totalorder %s74, %s75
      %p86 = scmp.eq.s32.totalorder %s26, 0
      %p87 = por %p85, %p86
      %p88 = scmp.ne.s32.totalorder %s74, %s75
      %p89 = scmp.eq.s32.totalorder %s27, 1
      %p90 = por %p88, %p89
      %p92 = scmp.ne.s32.totalorder %s75, %s91
      %p93 = scmp.eq.s32.totalorder %s27, 0
      %p94 = por %p92, %p93
      %s96 = sadd.s32 %s95, 1
      %p99 = scmp.eq.s32.totalorder %s21, 1
      %p100 = scmp.ne.s32.totalorder %s95, %s97
      %p101 = scmp.eq.s32.totalorder %s21, 0
      %p102 = por %p100, %p101
      %p103 = scmp.ne.s32.totalorder %s95, %s97
      %p104 = scmp.eq.s32.totalorder %s26, 1
      %p105 = por %p103, %p104
      %p106 = scmp.ne.s32.totalorder %s97, %s98
      %p107 = scmp.eq.s32.totalorder %s26, 0
      %p108 = por %p106, %p107
      %p109 = scmp.ne.s32.totalorder %s97, %s98
      %p110 = scmp.eq.s32.totalorder %s27, 1
      %p111 = por %p109, %p110
      %p113 = scmp.ne.s32.totalorder %s98, %s112
      %p114 = scmp.eq.s32.totalorder %s27, 0
      %p115 = por %p113, %p114
      %s117 = sadd.s32 %s116, 1
      %p120 = scmp.eq.s32.totalorder %s21, 1
      %p121 = scmp.ne.s32.totalorder %s116, %s118
      %p122 = scmp.eq.s32.totalorder %s21, 0
      %p123 = por %p121, %p122
      %p124 = scmp.ne.s32.totalorder %s116, %s118
      %p125 = scmp.eq.s32.totalorder %s26, 1
      %p126 = por %p124, %p125
      %p127 = scmp.ne.s32.totalorder %s118, %s119
      %p128 = scmp.eq.s32.totalorder %s26, 0
      %p129 = por %p127, %p128
      %p130 = scmp.ne.s32.totalorder %s118, %s119
      %p131 = scmp.eq.s32.totalorder %s27, 1
      %p132 = por %p130, %p131
      %p134 = scmp.ne.s32.totalorder %s119, %s133
      %p135 = scmp.eq.s32.totalorder %s27, 0
      %p136 = por %p134, %p135
      %s138 = sadd.s32 %s137, 1
      %p141 = scmp.eq.s32.totalorder %s21, 1
      %p142 = scmp.ne.s32.totalorder %s137, %s139
      %p143 = scmp.eq.s32.totalorder %s21, 0
      %p144 = por %p142, %p143
      %p145 = scmp.ne.s32.totalorder %s137, %s139
      %p146 = scmp.eq.s32.totalorder %s26, 1
      %p147 = por %p145, %p146
      %p148 = scmp.ne.s32.totalorder %s139, %s140
      %p149 = scmp.eq.s32.totalorder %s26, 0
      %p150 = por %p148, %p149
      %p151 = scmp.ne.s32.totalorder %s139, %s140
      %p152 = scmp.eq.s32.totalorder %s27, 1
      %p153 = por %p151, %p152
      %p155 = scmp.ne.s32.totalorder %s140, %s154
      %p156 = scmp.eq.s32.totalorder %s27, 0
      %p157 = por %p155, %p156
      %s159 = sadd.s32 %s158, 1
      %p162 = scmp.eq.s32.totalorder %s21, 1
      %p163 = scmp.ne.s32.totalorder %s158, %s160
      %p164 = scmp.eq.s32.totalorder %s21, 0
      %p165 = por %p163, %p164
      %p166 = scmp.ne.s32.totalorder %s158, %s160
      %p167 = scmp.eq.s32.totalorder %s26, 1
      %p168 = por %p166, %p167
      %p169 = scmp.ne.s32.totalorder %s160, %s161
      %p170 = scmp.eq.s32.totalorder %s26, 0
      %p171 = por %p169, %p170
      %p172 = scmp.ne.s32.totalorder %s160, %s161
      %p173 = scmp.eq.s32.totalorder %s27, 1
      %p174 = por %p172, %p173
      %p176 = scmp.ne.s32.totalorder %s161, %s175
      %p177 = scmp.eq.s32.totalorder %s27, 0
      %p178 = por %p176, %p177
      %s180 = sadd.s32 %s179, 1
      %p183 = scmp.eq.s32.totalorder %s21, 1
      %p184 = scmp.ne.s32.totalorder %s179, %s181
      %p185 = scmp.eq.s32.totalorder %s21, 0
      %p186 = por %p184, %p185
      %p187 = scmp.ne.s32.totalorder %s179, %s181
      %p188 = scmp.eq.s32.totalorder %s26, 1
      %p189 = por %p187, %p188
      %p190 = scmp.ne.s32.totalorder %s181, %s182
      %p191 = scmp.eq.s32.totalorder %s26, 0
      %p192 = por %p190, %p191
      %p193 = scmp.ne.s32.totalorder %s181, %s182
      %p194 = scmp.eq.s32.totalorder %s27, 1
      %p195 = por %p193, %p194
      %p197 = scmp.ne.s32.totalorder %s182, %s196
      %p198 = scmp.eq.s32.totalorder %s27, 0
      %p199 = por %p197, %p198
      %s201 = sadd.s32 %s200, 1
      %p204 = scmp.eq.s32.totalorder %s21, 1
      %p205 = scmp.ne.s32.totalorder %s200, %s202
      %p206 = scmp.eq.s32.totalorder %s21, 0
      %p207 = por %p205, %p206
      %p208 = scmp.ne.s32.totalorder %s200, %s202
      %p209 = scmp.eq.s32.totalorder %s26, 1
      %p210 = por %p208, %p209
      %p211 = scmp.ne.s32.totalorder %s202, %s203
      %p212 = scmp.eq.s32.totalorder %s26, 0
      %p213 = por %p211, %p212
      %p214 = scmp.ne.s32.totalorder %s202, %s203
      %p215 = scmp.eq.s32.totalorder %s27, 1
      %p216 = por %p214, %p215
      %p218 = scmp.ne.s32.totalorder %s203, %s217
      %p219 = scmp.eq.s32.totalorder %s27, 0
      %p220 = por %p218, %p219
      %s222 = sadd.s32 %s221, 1
      %p225 = scmp.eq.s32.totalorder %s21, 1
      %p226 = scmp.ne.s32.totalorder %s221, %s223
      %p227 = scmp.eq.s32.totalorder %s21, 0
      %p228 = por %p226, %p227
      %p229 = scmp.ne.s32.totalorder %s221, %s223
      %p230 = scmp.eq.s32.totalorder %s26, 1
      %p231 = por %p229, %p230
      %p232 = scmp.ne.s32.totalorder %s223, %s224
      %p233 = scmp.eq.s32.totalorder %s26, 0
      %p234 = por %p232, %p233
      %p235 = scmp.ne.s32.totalorder %s223, %s224
      %p236 = scmp.eq.s32.totalorder %s27, 1
      %p237 = por %p235, %p236
      %p239 = scmp.ne.s32.totalorder %s224, %s238
      %p240 = scmp.eq.s32.totalorder %s27, 0
      %p241 = por %p239, %p240
      %s243 = sadd.s32 %s242, 1
      %p246 = scmp.eq.s32.totalorder %s21, 1
      %p247 = scmp.ne.s32.totalorder %s242, %s244
      %p248 = scmp.eq.s32.totalorder %s21, 0
      %p249 = por %p247, %p248
      %p250 = scmp.ne.s32.totalorder %s242, %s244
      %p251 = scmp.eq.s32.totalorder %s26, 1
      %p252 = por %p250, %p251
      %p253 = scmp.ne.s32.totalorder %s244, %s245
      %p254 = scmp.eq.s32.totalorder %s26, 0
      %p255 = por %p253, %p254
      %p256 = scmp.ne.s32.totalorder %s244, %s245
      %p257 = scmp.eq.s32.totalorder %s27, 1
      %p258 = por %p256, %p257
      %p260 = scmp.ne.s32.totalorder %s245, %s259
      %p261 = scmp.eq.s32.totalorder %s27, 0
      %p262 = por %p260, %p261
      %s264 = sadd.s32 %s263, 1
      %p267 = scmp.eq.s32.totalorder %s21, 1
      %p268 = scmp.ne.s32.totalorder %s263, %s265
      %p269 = scmp.eq.s32.totalorder %s21, 0
      %p270 = por %p268, %p269
      %p271 = scmp.ne.s32.totalorder %s263, %s265
      %p272 = scmp.eq.s32.totalorder %s26, 1
      %p273 = por %p271, %p272
      %p274 = scmp.ne.s32.totalorder %s265, %s266
      %p275 = scmp.eq.s32.totalorder %s26, 0
      %p276 = por %p274, %p275
      %p277 = scmp.ne.s32.totalorder %s265, %s266
      %p278 = scmp.eq.s32.totalorder %s27, 1
      %p279 = por %p277, %p278
      %p281 = scmp.ne.s32.totalorder %s266, %s280
      %p282 = scmp.eq.s32.totalorder %s27, 0
      %p283 = por %p281, %p282
      %s285 = sadd.s32 %s284, 1
      %p288 = scmp.eq.s32.totalorder %s21, 1
      %p289 = scmp.ne.s32.totalorder %s284, %s286
      %p290 = scmp.eq.s32.totalorder %s21, 0
      %p291 = por %p289, %p290
      %p292 = scmp.ne.s32.totalorder %s284, %s286
      %p293 = scmp.eq.s32.totalorder %s26, 1
      %p294 = por %p292, %p293
      %p295 = scmp.ne.s32.totalorder %s286, %s287
      %p296 = scmp.eq.s32.totalorder %s26, 0
      %p297 = por %p295, %p296
      %p298 = scmp.ne.s32.totalorder %s286, %s287
      %p299 = scmp.eq.s32.totalorder %s27, 1
      %p300 = por %p298, %p299
      %p302 = scmp.ne.s32.totalorder %s287, %s301
      %p303 = scmp.eq.s32.totalorder %s27, 0
      %p304 = por %p302, %p303
      %s305 = ssub.s32 %s28, %s40
      %s306 = ssub.s32 %s29, %s36
      %s307 = sor.u32 %s305, %s306
      %p308 = scmp.eq.s32.totalorder %s307, 0
      %s310 = sadd.s32 %s309, 1
      %s311 = scalar_select %p308, %s309, %s310
      %p314 = pneg %p308
      %p315 = scmp.eq.s32.totalorder %s21, 1
      %p316 = por %p314, %p315
      %p317 = scmp.ne.s32.totalorder %s309, %s312
      %p318 = scmp.eq.s32.totalorder %s21, 0
      %p319 = por %p317, %p318
      %p320 = scmp.ne.s32.totalorder %s309, %s312
      %p321 = scmp.eq.s32.totalorder %s26, 1
      %p322 = por %p320, %p321
      %p323 = scmp.ne.s32.totalorder %s312, %s313
      %p324 = scmp.eq.s32.totalorder %s26, 0
      %p325 = por %p323, %p324
      %p326 = scmp.ne.s32.totalorder %s312, %s313
      %p327 = scmp.eq.s32.totalorder %s27, 1
      %p328 = por %p326, %p327
      %p330 = scmp.ne.s32.totalorder %s313, %s329
      %p331 = scmp.eq.s32.totalorder %s27, 0
      %p332 = por %p330, %p331
      %p333 = scmp.le.s32.totalorder 1, %s21
      %p334 = scmp.lt.s32.totalorder %s21, 3
      %p335 = pnand %p333, %p334
      %p336 = pneg %p335
      // Predicated region
      $region9: #{tpu_custom_call.1} parent=5 // pred_check
        _
      $region10: #{tpu_custom_call.1} parent=5 // pred_check_branch
        %338 = sbr.rel (%p335) target = $region12
      $region11: #{tpu_custom_call.1} parent=5 // pred_region
        %s339 = ssub.s32 %s21, 1
        // Predicated region
        $region13: #{tpu_custom_call.1} parent=11 // pred_check
          %p340 = pneg %p108
        $region14: #{tpu_custom_call.1} parent=11 // pred_check_branch
          %342 = sbr.rel (%p340) target = $region16
        $region15: #{tpu_custom_call.1} parent=11 // pred_region
          _
        $region16: #{tpu_custom_call.1} parent=11 // pred_fallthru
          _
        // Predicated region
        $region17: #{tpu_custom_call.1} parent=11 // pred_check
          %p343 = pneg %p129
        $region18: #{tpu_custom_call.1} parent=11 // pred_check_branch
          %345 = sbr.rel (%p343) target = $region20
        $region19: #{tpu_custom_call.1} parent=11 // pred_region
          _
        $region20: #{tpu_custom_call.1} parent=11 // pred_fallthru
          _
        // Predicated region
        $region21: #{tpu_custom_call.1} parent=11 // pred_check
          %p346 = pneg %p150
        $region22: #{tpu_custom_call.1} parent=11 // pred_check_branch
          %348 = sbr.rel (%p346) target = $region24
        $region23: #{tpu_custom_call.1} parent=11 // pred_region
          _
        $region24: #{tpu_custom_call.1} parent=11 // pred_fallthru
          _
        // Predicated region
        $region25: #{tpu_custom_call.1} parent=11 // pred_check
          %p349 = pneg %p171
        $region26: #{tpu_custom_call.1} parent=11 // pred_check_branch
          %351 = sbr.rel (%p349) target = $region28
        $region27: #{tpu_custom_call.1} parent=11 // pred_region
          _
        $region28: #{tpu_custom_call.1} parent=11 // pred_fallthru
          _
        // Predicated region
        $region29: #{tpu_custom_call.1} parent=11 // pred_check
          %p352 = pneg %p192
        $region30: #{tpu_custom_call.1} parent=11 // pred_check_branch
          %354 = sbr.rel (%p352) target = $region32
        $region31: #{tpu_custom_call.1} parent=11 // pred_region
          _
        $region32: #{tpu_custom_call.1} parent=11 // pred_fallthru
          _
        // Predicated region
        $region33: #{tpu_custom_call.1} parent=11 // pred_check
          %p355 = pneg %p213
        $region34: #{tpu_custom_call.1} parent=11 // pred_check_branch
          %357 = sbr.rel (%p355) target = $region36
        $region35: #{tpu_custom_call.1} parent=11 // pred_region
          _
        $region36: #{tpu_custom_call.1} parent=11 // pred_fallthru
          _
        // Predicated region
        $region37: #{tpu_custom_call.1} parent=11 // pred_check
          %p358 = pneg %p234
        $region38: #{tpu_custom_call.1} parent=11 // pred_check_branch
          %360 = sbr.rel (%p358) target = $region40
        $region39: #{tpu_custom_call.1} parent=11 // pred_region
          _
        $region40: #{tpu_custom_call.1} parent=11 // pred_fallthru
          _
        // Predicated region
        $region41: #{tpu_custom_call.1} parent=11 // pred_check
          %p361 = pneg %p255
        $region42: #{tpu_custom_call.1} parent=11 // pred_check_branch
          %363 = sbr.rel (%p361) target = $region44
        $region43: #{tpu_custom_call.1} parent=11 // pred_region
          _
        $region44: #{tpu_custom_call.1} parent=11 // pred_fallthru
          _
        // Predicated region
        $region45: #{tpu_custom_call.1} parent=11 // pred_check
          %p364 = pneg %p276
        $region46: #{tpu_custom_call.1} parent=11 // pred_check_branch
          %366 = sbr.rel (%p364) target = $region48
        $region47: #{tpu_custom_call.1} parent=11 // pred_region
          _
        $region48: #{tpu_custom_call.1} parent=11 // pred_fallthru
          _
        // Predicated region
        $region49: #{tpu_custom_call.1} parent=11 // pred_check
          %p367 = pneg %p297
        $region50: #{tpu_custom_call.1} parent=11 // pred_check_branch
          %369 = sbr.rel (%p367) target = $region52
        $region51: #{tpu_custom_call.1} parent=11 // pred_region
          _
        $region52: #{tpu_custom_call.1} parent=11 // pred_fallthru
          _
      $region12: #{tpu_custom_call.1} parent=5 // pred_fallthru
        _
      %p370 = scmp.lt.s32.totalorder %s21, 2
      // Predicated region
      $region53: #{tpu_custom_call.1} parent=5 // pred_check
        %p371 = pneg %p370
      $region54: #{tpu_custom_call.1} parent=5 // pred_check_branch
        %373 = sbr.rel (%p371) target = $region56
      $region55: #{tpu_custom_call.1} parent=5 // pred_region
        // Predicated region
        $region57: #{tpu_custom_call.1} parent=55 // pred_check
          %p374 = pneg %p55
        $region58: #{tpu_custom_call.1} parent=55 // pred_check_branch
          %376 = sbr.rel (%p374) target = $region60
        $region59: #{tpu_custom_call.1} parent=55 // pred_region
          %p377 = scmp.lt.s32.totalorder %s28, 1
          %s378 = scalar_select %p377, %s28, 1
          %p379 = scmp.lt.s32.totalorder %s29, 0
          %s380 = scalar_select %p379, %s29, 0
          %s381 = sadd.s32 %s380, %s378
          %s382 = smul.addr %s381, 4
          %s383 = scalar_lea.vmem %s0, %s382
        $region60: #{tpu_custom_call.1} parent=55 // pred_fallthru
          _
        // Predicated region
        $region61: #{tpu_custom_call.1} parent=55 // pred_check
          %p384 = pneg %p81
        $region62: #{tpu_custom_call.1} parent=55 // pred_check_branch
          %386 = sbr.rel (%p384) target = $region64
        $region63: #{tpu_custom_call.1} parent=55 // pred_region
          %p387 = scmp.lt.s32.totalorder %s28, 1
          %s388 = scalar_select %p387, %s28, 1
          %s389 = smul.addr %s388, 4
          %s390 = smul.addr %s389, 4
          %s391 = scalar_lea.vmem %s1, %s390
        $region64: #{tpu_custom_call.1} parent=55 // pred_fallthru
          _
      $region56: #{tpu_custom_call.1} parent=5 // pred_fallthru
        _
      %p392 = scmp.le.s32.totalorder 1, %s21
      %p393 = scmp.lt.s32.totalorder %s21, 3
      %p394 = pnand %p392, %p393
      %p395 = pneg %p394
      // Predicated region
      $region65: #{tpu_custom_call.1} parent=5 // pred_check
        _
      $region66: #{tpu_custom_call.1} parent=5 // pred_check_branch
        %397 = sbr.rel (%p394) target = $region68
      $region67: #{tpu_custom_call.1} parent=5 // pred_region
        %s398 = ssub.s32 %s21, 1
        %p399 = scmp.lt.s32.totalorder %s30, 1
        %s400 = scalar_select %p399, %s30, 1
        %p401 = scmp.lt.s32.totalorder %s31, 0
        %s402 = scalar_select %p401, %s31, 0
        %s403 = sadd.s32 %s402, %s400
        %s404 = smul.addr %s403, 4
        %s405 = scalar_lea.vmem %s0, %s404
        %p406 = pneg %p61
        %p407 = pneg %p58
        %p408 = scmp.lt.s32.totalorder %s30, 1
        %s409 = scalar_select %p408, %s30, 1
        %s410 = smul.addr %s409, 4
        %s411 = smul.addr %s410, 4
        %s412 = scalar_lea.vmem %s1, %s411
        %p413 = pneg %p87
        %p414 = pneg %p84
        %p415 = pneg %p108
        %p416 = pneg %p105
        %p417 = pneg %p129
        %p418 = pneg %p126
        %p419 = pneg %p150
        %p420 = pneg %p147
        %p421 = pneg %p171
        %p422 = pneg %p168
        %p423 = pneg %p192
        %p424 = pneg %p189
        %p425 = pneg %p213
        %p426 = pneg %p210
        %p427 = pneg %p234
        %p428 = pneg %p231
        %p429 = pneg %p255
        %p430 = pneg %p252
        %p431 = pneg %p276
        %p432 = pneg %p273
        %p433 = pneg %p297
        %p434 = pneg %p294
        %p435 = pneg %p325
        %p436 = pneg %p322
        %s437 = sand.u32 %s312, 1
        %s438 = scalar_lea.sflag [#allocation3], %s437
        %s439 = sand.u32 %s312, 1
        %s440 = smul.addr %s439, 8
        %s441 = scalar_lea.vmem [#allocation2], %s440
        %p442 = scmp.lt.s32.totalorder %s30, 1
        %s443 = scalar_select %p442, %s30, 1
        %p444 = scmp.lt.s32.totalorder %s31, 0
        %s445 = scalar_select %p444, %s31, 0
        %s446 = sadd.s32 %s445, %s443
        %s447 = smul.addr %s446, 4
        %s448 = scalar_lea.vmem %s0, %s447
        %p449 = scmp.lt.s32.totalorder %s30, 1
        %s450 = scalar_select %p449, %s30, 1
        %s451 = smul.addr %s450, 4
        %s452 = smul.addr %s451, 4
        %s453 = scalar_lea.vmem %s1, %s452
        %v455 = vld [vmem:[%s448] sm:$0x7]
        %v456 = vld [vmem:[%s2] sm:$0xff]
        %v457 = vld [vmem:[%s2 + $0x8] sm:$0xff]
        %v458 = vld [vmem:[%s2 + $0x10] sm:$0xff]
        %v459 = vld [vmem:[%s2 + $0x18] sm:$0xff]
        %v460 = vld [vmem:[%s3] sm:$0xff]
        %v461 = vld [vmem:[%s3 + $0x8] sm:$0xff]
        %v462 = vld [vmem:[%s3 + $0x10] sm:$0xff]
        %v463 = vld [vmem:[%s3 + $0x18] sm:$0xff]
        %465 = vset.pattern.permute.xlu0 0
        %466 = vperm.xlu0 %465, %v456
        %v467 = vpop.permute.xlu0 %466
        %470 = vset.pattern.permute.xlu0 0
        %471 = vperm.xlu0 %470, %v457
        %v472 = vpop.permute.xlu0 %471
        %475 = vset.pattern.permute.xlu0 0
        %476 = vperm.xlu0 %475, %v458
        %v477 = vpop.permute.xlu0 %476
        %480 = vset.pattern.permute.xlu0 0
        %481 = vperm.xlu0 %480, %v459
        %v482 = vpop.permute.xlu0 %481
        %v484 = vlaneseq
        %v485 = vshrl.u32 %v484, 7
        %v486 = vsub.s32 0, %v485
        %v487 = vrot.slane %v455, %v486
        %v488 = vmul.f32 %v467, %v487
        %v489 = vmul.f32 %v472, %v487
        %v490 = vmul.f32 %v477, %v487
        %v491 = vmul.f32 %v482, %v487
        %493 = vset.pattern.permute.xlu0 0
        %494 = vperm.xlu0 %493, %v460
        %v495 = vpop.permute.xlu0 %494
        %498 = vset.pattern.permute.xlu0 0
        %499 = vperm.xlu0 %498, %v461
        %v500 = vpop.permute.xlu0 %499
        %503 = vset.pattern.permute.xlu0 0
        %504 = vperm.xlu0 %503, %v462
        %v505 = vpop.permute.xlu0 %504
        %508 = vset.pattern.permute.xlu0 0
        %509 = vperm.xlu0 %508, %v463
        %v510 = vpop.permute.xlu0 %509
        %v512 = vadd.f32 %v495, %v488
        %v513 = vadd.f32 %v500, %v489
        %v514 = vadd.f32 %v505, %v490
        %v515 = vadd.f32 %v510, %v491
        %516 = vset.pattern.permute.xlu0 1
        %517 = vperm.xlu0 %516, %v456
        %v518 = vpop.permute.xlu0 %517
        %520 = vset.pattern.permute.xlu0 1
        %521 = vperm.xlu0 %520, %v457
        %v522 = vpop.permute.xlu0 %521
        %524 = vset.pattern.permute.xlu0 1
        %525 = vperm.xlu0 %524, %v458
        %v526 = vpop.permute.xlu0 %525
        %528 = vset.pattern.permute.xlu0 1
        %529 = vperm.xlu0 %528, %v459
        %v530 = vpop.permute.xlu0 %529
        %v532 = vlaneseq
        %v533 = vshrl.u32 %v532, 7
        %v534 = vsub.s32 1, %v533
        %v535 = vrot.slane %v455, %v534
        %v536 = vmul.f32 %v518, %v535
        %v537 = vmul.f32 %v522, %v535
        %v538 = vmul.f32 %v526, %v535
        %v539 = vmul.f32 %v530, %v535
        %v540 = vadd.f32 %v512, %v536
        %v541 = vadd.f32 %v513, %v537
        %v542 = vadd.f32 %v514, %v538
        %v543 = vadd.f32 %v515, %v539
        %544 = vset.pattern.permute.xlu0 2
        %545 = vperm.xlu0 %544, %v456
        %v546 = vpop.permute.xlu0 %545
        %548 = vset.pattern.permute.xlu0 2
        %549 = vperm.xlu0 %548, %v457
        %v550 = vpop.permute.xlu0 %549
        %552 = vset.pattern.permute.xlu0 2
        %553 = vperm.xlu0 %552, %v458
        %v554 = vpop.permute.xlu0 %553
        %556 = vset.pattern.permute.xlu0 2
        %557 = vperm.xlu0 %556, %v459
        %v558 = vpop.permute.xlu0 %557
        %v560 = vlaneseq
        %v561 = vshrl.u32 %v560, 7
        %v562 = vsub.s32 2, %v561
        %v563 = vrot.slane %v455, %v562
        %v564 = vmul.f32 %v546, %v563
        %v565 = vmul.f32 %v550, %v563
        %v566 = vmul.f32 %v554, %v563
        %v567 = vmul.f32 %v558, %v563
        %v568 = vadd.f32 %v540, %v564
        %v569 = vadd.f32 %v541, %v565
        %v570 = vadd.f32 %v542, %v566
        %v571 = vadd.f32 %v543, %v567
        %v572 = vld [vmem:[%s4] sm:$0xf]
        %v573 = vld [vmem:[%s4 + $0x4] sm:$0xf]
        %v574 = vld [vmem:[%s4 + $0x8] sm:$0xf]
        %v575 = vld [vmem:[%s4 + $0xc] sm:$0xf]
        %v576 = vld [vmem:[%s4 + $0x10] sm:$0xf]
        %v577 = vld [vmem:[%s4 + $0x14] sm:$0xf]
        %v578 = vld [vmem:[%s4 + $0x18] sm:$0xf]
        %v579 = vld [vmem:[%s4 + $0x1c] sm:$0xf]
        %v580 = vld [vmem:[%s4 + $0x20] sm:$0xf]
        %v581 = vld [vmem:[%s4 + $0x24] sm:$0xf]
        %v582 = vld [vmem:[%s4 + $0x28] sm:$0xf]
        %v583 = vld [vmem:[%s4 + $0x2c] sm:$0xf]
        %v584 = vld [vmem:[%s453] sm:$0xf]
        %v585 = vld [vmem:[%s453 + $0x4] sm:$0xf]
        %v586 = vld [vmem:[%s453 + $0x8] sm:$0xf]
        %v587 = vld [vmem:[%s453 + $0xc] sm:$0xf]
        %v588 = vld [vmem:[%s5] sm:$0xff]
        %v589 = vld [vmem:[%s5 + $0x8] sm:$0xff]
        %v590 = vld [vmem:[%s5 + $0x10] sm:$0xff]
        %v591 = vld [vmem:[%s5 + $0x18] sm:$0xff]
        %v592 = vld [vmem:[%s5 + $0x20] sm:$0xff]
        %v593 = vld [vmem:[%s5 + $0x28] sm:$0xff]
        %v594 = vld [vmem:[%s5 + $0x30] sm:$0xff]
        %v595 = vld [vmem:[%s5 + $0x38] sm:$0xff]
        %v596 = vld [vmem:[%s5 + $0x40] sm:$0xff]
        %v597 = vld [vmem:[%s5 + $0x48] sm:$0xff]
        %v598 = vld [vmem:[%s5 + $0x50] sm:$0xff]
        %v599 = vld [vmem:[%s5 + $0x58] sm:$0xff]
        %v612 = vunpack.c.l.b16 %v572
        %v613 = vunpack.c.l.b16 %v573
        %v614 = vunpack.c.l.b16 %v574
        %v615 = vunpack.c.l.b16 %v575
        %v616 = vunpack.c.l.b16 %v576
        %v617 = vunpack.c.l.b16 %v577
        %v618 = vunpack.c.l.b16 %v578
        %v619 = vunpack.c.l.b16 %v579
        %v620 = vunpack.c.l.b16 %v580
        %v621 = vunpack.c.l.b16 %v581
        %v622 = vunpack.c.l.b16 %v582
        %v623 = vunpack.c.l.b16 %v583
        %v624 = vpack.c.b16 %v613, %v612
        %v625 = vpack.c.b16 %v615, %v614
        %v626 = vpack.c.b16 %v617, %v616
        %v627 = vpack.c.b16 %v619, %v618
        %v628 = vpack.c.b16 %v621, %v620
        %v629 = vpack.c.b16 %v623, %v622
        %v634 = vunpack.c.l.b16 %v584
        %v635 = vunpack.c.l.b16 %v585
        %v636 = vunpack.c.l.b16 %v586
        %v637 = vunpack.c.l.b16 %v587
        %v638 = vpack.c.b16 %v635, %v634
        %v639 = vpack.c.b16 %v637, %v636
        %vm642 = vcmask 261120
        %v644 = vsel %vm642, %v624, 0
        %v647 = vsel %vm642, %v625, 0
        %v650 = vsel %vm642, %v626, 0
        %v653 = vsel %vm642, %v627, 0
        %v656 = vsel %vm642, %v628, 0
        %v659 = vsel %vm642, %v629, 0
        %661 = vmatprep.subr.bf16.mxu0 0
        %662 = vmatpush1.bf16.msra.mxu0 %v638
        %663 = vmatprep.subr.bf16.mxu0 0
        %664 = vmatpush1.bf16.msra.mxu0 %v639
        %665 = vmatprep.subr.bf16.mxu0 0
        %666 = vmatpush1.bf16.msra.mxu0 0
        %667 = vmatprep.subr.bf16.mxu0 0
        %668 = vmatpush1.bf16.msra.mxu0 0
        %669 = vmatprep.subr.bf16.mxu0 0
        %670 = vmatpush1.bf16.msra.mxu0 0
        %671 = vmatprep.subr.bf16.mxu0 0
        %672 = vmatpush1.bf16.msra.mxu0 0
        %673 = vmatprep.subr.bf16.mxu0 0
        %674 = vmatpush1.bf16.msra.mxu0 0
        %675 = vmatprep.subr.bf16.mxu0 0
        %676 = vmatpush1.bf16.msra.mxu0 0
        %677 = vmatprep.subr.bf16.mxu0 0
        %678 = vmatpush1.bf16.msra.mxu0 0
        %679 = vmatprep.subr.bf16.mxu0 0
        %680 = vmatpush1.bf16.msra.mxu0 0
        %681 = vmatprep.subr.bf16.mxu0 0
        %682 = vmatpush1.bf16.msra.mxu0 0
        %683 = vmatprep.subr.bf16.mxu0 0
        %684 = vmatpush1.bf16.msra.mxu0 0
        %685 = vmatprep.subr.bf16.mxu0 0
        %686 = vmatpush1.bf16.msra.mxu0 0
        %687 = vmatprep.subr.bf16.mxu0 0
        %688 = vmatpush1.bf16.msra.mxu0 0
        %689 = vmatprep.subr.bf16.mxu0 0
        %690 = vmatpush1.bf16.msra.mxu0 0
        %691 = vmatprep.subr.bf16.mxu0 0
        %692 = vmatpush1.bf16.msra.mxu0 0
        %693 = vmatprep.mubr.bf16.mxu0 0
        %694 = vmatmul.mubr.bf16.gmra.mrb[0].mxu0 %v644
        %v695 = vpop.f32.mrb[0].mxu0
        %v696 = vadd.f32 %v588, %v695
        %v697 = vpop.f32.mrb[0].mxu0
        %v698 = vpop.f32.mrb[0].mxu0
        %v699 = vadd.f32 %v589, %v698
        %v700 = vpop.f32.mrb[0].mxu0
        %701 = vmatprep.mubr.bf16.mxu0 0
        %702 = vmatmul.mubr.bf16.gmra.mrb[0].mxu0 %v647
        %v703 = vpop.f32.mrb[0].mxu0
        %v704 = vadd.f32 %v590, %v703
        %v705 = vpop.f32.mrb[0].mxu0
        %v706 = vpop.f32.mrb[0].mxu0
        %v707 = vadd.f32 %v591, %v706
        %v708 = vpop.f32.mrb[0].mxu0
        %709 = vmatprep.mubr.bf16.mxu0 0
        %710 = vmatmul.mubr.bf16.gmra.mrb[0].mxu0 %v650
        %v711 = vpop.f32.mrb[0].mxu0
        %v712 = vadd.f32 %v592, %v711
        %v713 = vpop.f32.mrb[0].mxu0
        %v714 = vpop.f32.mrb[0].mxu0
        %v715 = vadd.f32 %v593, %v714
        %v716 = vpop.f32.mrb[0].mxu0
        %717 = vmatprep.mubr.bf16.mxu0 0
        %718 = vmatmul.mubr.bf16.gmra.mrb[0].mxu0 %v653
        %v719 = vpop.f32.mrb[0].mxu0
        %v720 = vadd.f32 %v594, %v719
        %v721 = vpop.f32.mrb[0].mxu0
        %v722 = vpop.f32.mrb[0].mxu0
        %v723 = vadd.f32 %v595, %v722
        %v724 = vpop.f32.mrb[0].mxu0
        %725 = vmatprep.mubr.bf16.mxu0 0
        %726 = vmatmul.mubr.bf16.gmra.mrb[0].mxu0 %v656
        %v727 = vpop.f32.mrb[0].mxu0
        %v728 = vadd.f32 %v596, %v727
        %v729 = vpop.f32.mrb[0].mxu0
        %v730 = vpop.f32.mrb[0].mxu0
        %v731 = vadd.f32 %v597, %v730
        %v732 = vpop.f32.mrb[0].mxu0
        %733 = vmatprep.mubr.bf16.mxu0 0
        %734 = vmatmul.mubr.bf16.gmra.mrb[0].mxu0 %v659
        %v735 = vpop.f32.mrb[0].mxu0
        %v736 = vadd.f32 %v598, %v735
        %v737 = vpop.f32.mrb[0].mxu0
        %v738 = vpop.f32.mrb[0].mxu0
        %v739 = vadd.f32 %v599, %v738
        %v740 = vpop.f32.mrb[0].mxu0
        %741 = vdwg.mxu0
        %743 = vset.pattern.permute.xlu0 0
        %744 = vperm.xlu0 %743, %v696
        %v745 = vpop.permute.xlu0 %744
        %748 = vset.pattern.permute.xlu0 0
        %749 = vperm.xlu0 %748, %v699
        %v750 = vpop.permute.xlu0 %749
        %753 = vset.pattern.permute.xlu0 0
        %754 = vperm.xlu0 %753, %v704
        %v755 = vpop.permute.xlu0 %754
        %758 = vset.pattern.permute.xlu0 0
        %759 = vperm.xlu0 %758, %v707
        %v760 = vpop.permute.xlu0 %759
        %v762 = vadd.f32 %v568, %v745
        %v763 = vadd.f32 %v569, %v750
        %v764 = vadd.f32 %v570, %v755
        %v765 = vadd.f32 %v571, %v760
        %v766 = vmax.f32 %v762, 0.0
        %v767 = vmax.f32 %v763, 0.0
        %v768 = vmax.f32 %v764, 0.0
        %v769 = vmax.f32 %v765, 0.0
        %v770 = vld [vmem:[%s6] sm:$0xf]
        %v771 = vld [vmem:[%s6 + $0x4] sm:$0xf]
        %v772 = vld [vmem:[%s6 + $0x8] sm:$0xf]
        %v773 = vld [vmem:[%s6 + $0xc] sm:$0xf]
        %v774 = vpack.c.bf16 %v767, %v766
        %v775 = vpack.c.bf16 %v769, %v768
        %v776 = vld [vmem:[%s7] sm:$0xff]
        %v777 = vld [vmem:[%s7 + $0x8] sm:$0xff]
        %v778 = vld [vmem:[%s7 + $0x10] sm:$0xff]
        %v779 = vld [vmem:[%s7 + $0x18] sm:$0xff]
        %781 = vset.pattern.permute.xlu0 0
        %782 = vperm.xlu0 %781, %v776
        %v783 = vpop.permute.xlu0 %782
        %786 = vset.pattern.permute.xlu0 0
        %787 = vperm.xlu0 %786, %v777
        %v788 = vpop.permute.xlu0 %787
        %791 = vset.pattern.permute.xlu0 0
        %792 = vperm.xlu0 %791, %v778
        %v793 = vpop.permute.xlu0 %792
        %796 = vset.pattern.permute.xlu0 0
        %797 = vperm.xlu0 %796, %v779
        %v798 = vpop.permute.xlu0 %797
        %v804 = vunpack.c.l.b16 %v770
        %v805 = vunpack.c.l.b16 %v771
        %v806 = vunpack.c.l.b16 %v772
        %v807 = vunpack.c.l.b16 %v773
        %v808 = vpack.c.b16 %v805, %v804
        %v809 = vpack.c.b16 %v807, %v806
        %v811 = vsel %vm642, %v808, 0
        %v814 = vsel %vm642, %v809, 0
        %816 = vmatprep.subr.bf16.mxu0 0
        %817 = vmatpush1.bf16.msra.mxu0 %v774
        %818 = vmatprep.subr.bf16.mxu0 0
        %819 = vmatpush1.bf16.msra.mxu0 %v775
        %820 = vmatprep.subr.bf16.mxu0 0
        %821 = vmatpush1.bf16.msra.mxu0 0
        %822 = vmatprep.subr.bf16.mxu0 0
        %823 = vmatpush1.bf16.msra.mxu0 0
        %824 = vmatprep.subr.bf16.mxu0 0
        %825 = vmatpush1.bf16.msra.mxu0 0
        %826 = vmatprep.subr.bf16.mxu0 0
        %827 = vmatpush1.bf16.msra.mxu0 0
        %828 = vmatprep.subr.bf16.mxu0 0
        %829 = vmatpush1.bf16.msra.mxu0 0
        %830 = vmatprep.subr.bf16.mxu0 0
        %831 = vmatpush1.bf16.msra.mxu0 0
        %832 = vmatprep.subr.bf16.mxu0 0
        %833 = vmatpush1.bf16.msra.mxu0 0
        %834 = vmatprep.subr.bf16.mxu0 0
        %835 = vmatpush1.bf16.msra.mxu0 0
        %836 = vmatprep.subr.bf16.mxu0 0
        %837 = vmatpush1.bf16.msra.mxu0 0
        %838 = vmatprep.subr.bf16.mxu0 0
        %839 = vmatpush1.bf16.msra.mxu0 0
        %840 = vmatprep.subr.bf16.mxu0 0
        %841 = vmatpush1.bf16.msra.mxu0 0
        %842 = vmatprep.subr.bf16.mxu0 0
        %843 = vmatpush1.bf16.msra.mxu0 0
        %844 = vmatprep.subr.bf16.mxu0 0
        %845 = vmatpush1.bf16.msra.mxu0 0
        %846 = vmatprep.subr.bf16.mxu0 0
        %847 = vmatpush1.bf16.msra.mxu0 0
        %848 = vmatprep.mubr.bf16.mxu0 0
        %849 = vmatmul.mubr.bf16.gmra.mrb[0].mxu0 %v811
        %v850 = vpop.f32.mrb[0].mxu0
        %v851 = vadd.f32 %v783, %v850
        %v852 = vpop.f32.mrb[0].mxu0
        %v853 = vpop.f32.mrb[0].mxu0
        %v854 = vadd.f32 %v788, %v853
        %v855 = vpop.f32.mrb[0].mxu0
        %856 = vmatprep.mubr.bf16.mxu0 0
        %857 = vmatmul.mubr.bf16.gmra.mrb[0].mxu0 %v814
        %v858 = vpop.f32.mrb[0].mxu0
        %v859 = vadd.f32 %v793, %v858
        %v860 = vpop.f32.mrb[0].mxu0
        %v861 = vpop.f32.mrb[0].mxu0
        %v862 = vadd.f32 %v798, %v861
        %v863 = vpop.f32.mrb[0].mxu0
        %864 = vdwg.mxu0
        %v865 = vmax.f32 %v851, 0.0
        %v866 = vmax.f32 %v854, 0.0
        %v867 = vmax.f32 %v859, 0.0
        %v868 = vmax.f32 %v862, 0.0
        %v869 = vld [vmem:[%s8] sm:$0xf]
        %v870 = vld [vmem:[%s8 + $0x4] sm:$0xf]
        %v871 = vld [vmem:[%s8 + $0x8] sm:$0xf]
        %v872 = vld [vmem:[%s8 + $0xc] sm:$0xf]
        %v873 = vpack.c.bf16 %v866, %v865
        %v874 = vpack.c.bf16 %v868, %v867
        %v875 = vld [vmem:[%s9] sm:$0xff]
        %v876 = vld [vmem:[%s9 + $0x8] sm:$0xff]
        %v877 = vld [vmem:[%s9 + $0x10] sm:$0xff]
        %v878 = vld [vmem:[%s9 + $0x18] sm:$0xff]
        %880 = vset.pattern.permute.xlu0 0
        %881 = vperm.xlu0 %880, %v875
        %v882 = vpop.permute.xlu0 %881
        %885 = vset.pattern.permute.xlu0 0
        %886 = vperm.xlu0 %885, %v876
        %v887 = vpop.permute.xlu0 %886
        %890 = vset.pattern.permute.xlu0 0
        %891 = vperm.xlu0 %890, %v877
        %v892 = vpop.permute.xlu0 %891
        %895 = vset.pattern.permute.xlu0 0
        %896 = vperm.xlu0 %895, %v878
        %v897 = vpop.permute.xlu0 %896
        %v903 = vunpack.c.l.b16 %v869
        %v904 = vunpack.c.l.b16 %v870
        %v905 = vunpack.c.l.b16 %v871
        %v906 = vunpack.c.l.b16 %v872
        %v907 = vpack.c.b16 %v904, %v903
        %v908 = vpack.c.b16 %v906, %v905
        %v910 = vsel %vm642, %v907, 0
        %v913 = vsel %vm642, %v908, 0
        %915 = vmatprep.subr.bf16.mxu0 0
        %916 = vmatpush1.bf16.msra.mxu0 %v873
        %917 = vmatprep.subr.bf16.mxu0 0
        %918 = vmatpush1.bf16.msra.mxu0 %v874
        %919 = vmatprep.subr.bf16.mxu0 0
        %920 = vmatpush1.bf16.msra.mxu0 0
        %921 = vmatprep.subr.bf16.mxu0 0
        %922 = vmatpush1.bf16.msra.mxu0 0
        %923 = vmatprep.subr.bf16.mxu0 0
        %924 = vmatpush1.bf16.msra.mxu0 0
        %925 = vmatprep.subr.bf16.mxu0 0
        %926 = vmatpush1.bf16.msra.mxu0 0
        %927 = vmatprep.subr.bf16.mxu0 0
        %928 = vmatpush1.bf16.msra.mxu0 0
        %929 = vmatprep.subr.bf16.mxu0 0
        %930 = vmatpush1.bf16.msra.mxu0 0
        %931 = vmatprep.subr.bf16.mxu0 0
        %932 = vmatpush1.bf16.msra.mxu0 0
        %933 = vmatprep.subr.bf16.mxu0 0
        %934 = vmatpush1.bf16.msra.mxu0 0
        %935 = vmatprep.subr.bf16.mxu0 0
        %936 = vmatpush1.bf16.msra.mxu0 0
        %937 = vmatprep.subr.bf16.mxu0 0
        %938 = vmatpush1.bf16.msra.mxu0 0
        %939 = vmatprep.subr.bf16.mxu0 0
        %940 = vmatpush1.bf16.msra.mxu0 0
        %941 = vmatprep.subr.bf16.mxu0 0
        %942 = vmatpush1.bf16.msra.mxu0 0
        %943 = vmatprep.subr.bf16.mxu0 0
        %944 = vmatpush1.bf16.msra.mxu0 0
        %945 = vmatprep.subr.bf16.mxu0 0
        %946 = vmatpush1.bf16.msra.mxu0 0
        %947 = vmatprep.mubr.bf16.mxu0 0
        %948 = vmatmul.mubr.bf16.gmra.mrb[0].mxu0 %v910
        %v949 = vpop.f32.mrb[0].mxu0
        %v950 = vadd.f32 %v882, %v949
        %v951 = vpop.f32.mrb[0].mxu0
        %v952 = vpop.f32.mrb[0].mxu0
        %v953 = vadd.f32 %v887, %v952
        %v954 = vpop.f32.mrb[0].mxu0
        %955 = vmatprep.mubr.bf16.mxu0 0
        %956 = vmatmul.mubr.bf16.gmra.mrb[0].mxu0 %v913
        %v957 = vpop.f32.mrb[0].mxu0
        %v958 = vadd.f32 %v892, %v957
        %v959 = vpop.f32.mrb[0].mxu0
        %v960 = vpop.f32.mrb[0].mxu0
        %v961 = vadd.f32 %v897, %v960
        %v962 = vpop.f32.mrb[0].mxu0
        %963 = vdwg.mxu0
        %v964 = vadd.f32 %v762, %v950
        %v965 = vadd.f32 %v763, %v953
        %v966 = vadd.f32 %v764, %v958
        %v967 = vadd.f32 %v765, %v961
        %969 = vset.pattern.permute.xlu0 0
        %970 = vperm.xlu0 %969, %v712
        %v971 = vpop.permute.xlu0 %970
        %974 = vset.pattern.permute.xlu0 0
        %975 = vperm.xlu0 %974, %v715
        %v976 = vpop.permute.xlu0 %975
        %979 = vset.pattern.permute.xlu0 0
        %980 = vperm.xlu0 %979, %v720
        %v981 = vpop.permute.xlu0 %980
        %984 = vset.pattern.permute.xlu0 0
        %985 = vperm.xlu0 %984, %v723
        %v986 = vpop.permute.xlu0 %985
        %v988 = vadd.f32 %v964, %v971
        %v989 = vadd.f32 %v965, %v976
        %v990 = vadd.f32 %v966, %v981
        %v991 = vadd.f32 %v967, %v986
        %v992 = vmax.f32 %v988, 0.0
        %v993 = vmax.f32 %v989, 0.0
        %v994 = vmax.f32 %v990, 0.0
        %v995 = vmax.f32 %v991, 0.0
        %v996 = vld [vmem:[%s6 + $0x10] sm:$0xf]
        %v997 = vld [vmem:[%s6 + $0x14] sm:$0xf]
        %v998 = vld [vmem:[%s6 + $0x18] sm:$0xf]
        %v999 = vld [vmem:[%s6 + $0x1c] sm:$0xf]
        %v1000 = vpack.c.bf16 %v993, %v992
        %v1001 = vpack.c.bf16 %v995, %v994
        %v1002 = vld [vmem:[%s7 + $0x20] sm:$0xff]
        %v1003 = vld [vmem:[%s7 + $0x28] sm:$0xff]
        %v1004 = vld [vmem:[%s7 + $0x30] sm:$0xff]
        %v1005 = vld [vmem:[%s7 + $0x38] sm:$0xff]
        %1007 = vset.pattern.permute.xlu0 0
        %1008 = vperm.xlu0 %1007, %v1002
        %v1009 = vpop.permute.xlu0 %1008
        %1012 = vset.pattern.permute.xlu0 0
        %1013 = vperm.xlu0 %1012, %v1003
        %v1014 = vpop.permute.xlu0 %1013
        %1017 = vset.pattern.permute.xlu0 0
        %1018 = vperm.xlu0 %1017, %v1004
        %v1019 = vpop.permute.xlu0 %1018
        %1022 = vset.pattern.permute.xlu0 0
        %1023 = vperm.xlu0 %1022, %v1005
        %v1024 = vpop.permute.xlu0 %1023
        %v1030 = vunpack.c.l.b16 %v996
        %v1031 = vunpack.c.l.b16 %v997
        %v1032 = vunpack.c.l.b16 %v998
        %v1033 = vunpack.c.l.b16 %v999
        %v1034 = vpack.c.b16 %v1031, %v1030
        %v1035 = vpack.c.b16 %v1033, %v1032
        %v1037 = vsel %vm642, %v1034, 0
        %v1040 = vsel %vm642, %v1035, 0
        %1042 = vmatprep.subr.bf16.mxu0 0
        %1043 = vmatpush1.bf16.msra.mxu0 %v1000
        %1044 = vmatprep.subr.bf16.mxu0 0
        %1045 = vmatpush1.bf16.msra.mxu0 %v1001
        %1046 = vmatprep.subr.bf16.mxu0 0
        %1047 = vmatpush1.bf16.msra.mxu0 0
        %1048 = vmatprep.subr.bf16.mxu0 0
        %1049 = vmatpush1.bf16.msra.mxu0 0
        %1050 = vmatprep.subr.bf16.mxu0 0
        %1051 = vmatpush1.bf16.msra.mxu0 0
        %1052 = vmatprep.subr.bf16.mxu0 0
        %1053 = vmatpush1.bf16.msra.mxu0 0
        %1054 = vmatprep.subr.bf16.mxu0 0
        %1055 = vmatpush1.bf16.msra.mxu0 0
        %1056 = vmatprep.subr.bf16.mxu0 0
        %1057 = vmatpush1.bf16.msra.mxu0 0
        %1058 = vmatprep.subr.bf16.mxu0 0
        %1059 = vmatpush1.bf16.msra.mxu0 0
        %1060 = vmatprep.subr.bf16.mxu0 0
        %1061 = vmatpush1.bf16.msra.mxu0 0
        %1062 = vmatprep.subr.bf16.mxu0 0
        %1063 = vmatpush1.bf16.msra.mxu0 0
        %1064 = vmatprep.subr.bf16.mxu0 0
        %1065 = vmatpush1.bf16.msra.mxu0 0
        %1066 = vmatprep.subr.bf16.mxu0 0
        %1067 = vmatpush1.bf16.msra.mxu0 0
        %1068 = vmatprep.subr.bf16.mxu0 0
        %1069 = vmatpush1.bf16.msra.mxu0 0
        %1070 = vmatprep.subr.bf16.mxu0 0
        %1071 = vmatpush1.bf16.msra.mxu0 0
        %1072 = vmatprep.subr.bf16.mxu0 0
        %1073 = vmatpush1.bf16.msra.mxu0 0
        %1074 = vmatprep.mubr.bf16.mxu0 0
        %1075 = vmatmul.mubr.bf16.gmra.mrb[0].mxu0 %v1037
        %v1076 = vpop.f32.mrb[0].mxu0
        %v1077 = vadd.f32 %v1009, %v1076
        %v1078 = vpop.f32.mrb[0].mxu0
        %v1079 = vpop.f32.mrb[0].mxu0
        %v1080 = vadd.f32 %v1014, %v1079
        %v1081 = vpop.f32.mrb[0].mxu0
        %1082 = vmatprep.mubr.bf16.mxu0 0
        %1083 = vmatmul.mubr.bf16.gmra.mrb[0].mxu0 %v1040
        %v1084 = vpop.f32.mrb[0].mxu0
        %v1085 = vadd.f32 %v1019, %v1084
        %v1086 = vpop.f32.mrb[0].mxu0
        %v1087 = vpop.f32.mrb[0].mxu0
        %v1088 = vadd.f32 %v1024, %v1087
        %v1089 = vpop.f32.mrb[0].mxu0
        %1090 = vdwg.mxu0
        %v1091 = vmax.f32 %v1077, 0.0
        %v1092 = vmax.f32 %v1080, 0.0
        %v1093 = vmax.f32 %v1085, 0.0
        %v1094 = vmax.f32 %v1088, 0.0
        %v1095 = vld [vmem:[%s8 + $0x10] sm:$0xf]
        %v1096 = vld [vmem:[%s8 + $0x14] sm:$0xf]
        %v1097 = vld [vmem:[%s8 + $0x18] sm:$0xf]
        %v1098 = vld [vmem:[%s8 + $0x1c] sm:$0xf]
        %v1099 = vpack.c.bf16 %v1092, %v1091
        %v1100 = vpack.c.bf16 %v1094, %v1093
        %v1101 = vld [vmem:[%s9 + $0x20] sm:$0xff]
        %v1102 = vld [vmem:[%s9 + $0x28] sm:$0xff]
        %v1103 = vld [vmem:[%s9 + $0x30] sm:$0xff]
        %v1104 = vld [vmem:[%s9 + $0x38] sm:$0xff]
        %1106 = vset.pattern.permute.xlu0 0
        %1107 = vperm.xlu0 %1106, %v1101
        %v1108 = vpop.permute.xlu0 %1107
        %1111 = vset.pattern.permute.xlu0 0
        %1112 = vperm.xlu0 %1111, %v1102
        %v1113 = vpop.permute.xlu0 %1112
        %1116 = vset.pattern.permute.xlu0 0
        %1117 = vperm.xlu0 %1116, %v1103
        %v1118 = vpop.permute.xlu0 %1117
        %1121 = vset.pattern.permute.xlu0 0
        %1122 = vperm.xlu0 %1121, %v1104
        %v1123 = vpop.permute.xlu0 %1122
        %v1129 = vunpack.c.l.b16 %v1095
        %v1130 = vunpack.c.l.b16 %v1096
        %v1131 = vunpack.c.l.b16 %v1097
        %v1132 = vunpack.c.l.b16 %v1098
        %v1133 = vpack.c.b16 %v1130, %v1129
        %v1134 = vpack.c.b16 %v1132, %v1131
        %v1136 = vsel %vm642, %v1133, 0
        %v1139 = vsel %vm642, %v1134, 0
        %1141 = vmatprep.subr.bf16.mxu0 0
        %1142 = vmatpush1.bf16.msra.mxu0 %v1099
        %1143 = vmatprep.subr.bf16.mxu0 0
        %1144 = vmatpush1.bf16.msra.mxu0 %v1100
        %1145 = vmatprep.subr.bf16.mxu0 0
        %1146 = vmatpush1.bf16.msra.mxu0 0
        %1147 = vmatprep.subr.bf16.mxu0 0
        %1148 = vmatpush1.bf16.msra.mxu0 0
        %1149 = vmatprep.subr.bf16.mxu0 0
        %1150 = vmatpush1.bf16.msra.mxu0 0
        %1151 = vmatprep.subr.bf16.mxu0 0
        %1152 = vmatpush1.bf16.msra.mxu0 0
        %1153 = vmatprep.subr.bf16.mxu0 0
        %1154 = vmatpush1.bf16.msra.mxu0 0
        %1155 = vmatprep.subr.bf16.mxu0 0
        %1156 = vmatpush1.bf16.msra.mxu0 0
        %1157 = vmatprep.subr.bf16.mxu0 0
        %1158 = vmatpush1.bf16.msra.mxu0 0
        %1159 = vmatprep.subr.bf16.mxu0 0
        %1160 = vmatpush1.bf16.msra.mxu0 0
        %1161 = vmatprep.subr.bf16.mxu0 0
        %1162 = vmatpush1.bf16.msra.mxu0 0
        %1163 = vmatprep.subr.bf16.mxu0 0
        %1164 = vmatpush1.bf16.msra.mxu0 0
        %1165 = vmatprep.subr.bf16.mxu0 0
        %1166 = vmatpush1.bf16.msra.mxu0 0
        %1167 = vmatprep.subr.bf16.mxu0 0
        %1168 = vmatpush1.bf16.msra.mxu0 0
        %1169 = vmatprep.subr.bf16.mxu0 0
        %1170 = vmatpush1.bf16.msra.mxu0 0
        %1171 = vmatprep.subr.bf16.mxu0 0
        %1172 = vmatpush1.bf16.msra.mxu0 0
        %1173 = vmatprep.mubr.bf16.mxu0 0
        %1174 = vmatmul.mubr.bf16.gmra.mrb[0].mxu0 %v1136
        %v1175 = vpop.f32.mrb[0].mxu0
        %v1176 = vadd.f32 %v1108, %v1175
        %v1177 = vpop.f32.mrb[0].mxu0
        %v1178 = vpop.f32.mrb[0].mxu0
        %v1179 = vadd.f32 %v1113, %v1178
        %v1180 = vpop.f32.mrb[0].mxu0
        %1181 = vmatprep.mubr.bf16.mxu0 0
        %1182 = vmatmul.mubr.bf16.gmra.mrb[0].mxu0 %v1139
        %v1183 = vpop.f32.mrb[0].mxu0
        %v1184 = vadd.f32 %v1118, %v1183
        %v1185 = vpop.f32.mrb[0].mxu0
        %v1186 = vpop.f32.mrb[0].mxu0
        %v1187 = vadd.f32 %v1123, %v1186
        %v1188 = vpop.f32.mrb[0].mxu0
        %1189 = vdwg.mxu0
        %v1190 = vadd.f32 %v988, %v1176
        %v1191 = vadd.f32 %v989, %v1179
        %v1192 = vadd.f32 %v990, %v1184
        %v1193 = vadd.f32 %v991, %v1187
        %1195 = vset.pattern.permute.xlu0 0
        %1196 = vperm.xlu0 %1195, %v728
        %v1197 = vpop.permute.xlu0 %1196
        %1200 = vset.pattern.permute.xlu0 0
        %1201 = vperm.xlu0 %1200, %v731
        %v1202 = vpop.permute.xlu0 %1201
        %1205 = vset.pattern.permute.xlu0 0
        %1206 = vperm.xlu0 %1205, %v736
        %v1207 = vpop.permute.xlu0 %1206
        %1210 = vset.pattern.permute.xlu0 0
        %1211 = vperm.xlu0 %1210, %v739
        %v1212 = vpop.permute.xlu0 %1211
        %v1214 = vadd.f32 %v1190, %v1197
        %v1215 = vadd.f32 %v1191, %v1202
        %v1216 = vadd.f32 %v1192, %v1207
        %v1217 = vadd.f32 %v1193, %v1212
        %v1218 = vmax.f32 %v1214, 0.0
        %v1219 = vmax.f32 %v1215, 0.0
        %v1220 = vmax.f32 %v1216, 0.0
        %v1221 = vmax.f32 %v1217, 0.0
        %v1222 = vld [vmem:[%s6 + $0x20] sm:$0xf]
        %v1223 = vld [vmem:[%s6 + $0x24] sm:$0xf]
        %v1224 = vld [vmem:[%s6 + $0x28] sm:$0xf]
        %v1225 = vld [vmem:[%s6 + $0x2c] sm:$0xf]
        %v1226 = vpack.c.bf16 %v1219, %v1218
        %v1227 = vpack.c.bf16 %v1221, %v1220
        %v1228 = vld [vmem:[%s7 + $0x40] sm:$0xff]
        %v1229 = vld [vmem:[%s7 + $0x48] sm:$0xff]
        %v1230 = vld [vmem:[%s7 + $0x50] sm:$0xff]
        %v1231 = vld [vmem:[%s7 + $0x58] sm:$0xff]
        %1233 = vset.pattern.permute.xlu0 0
        %1234 = vperm.xlu0 %1233, %v1228
        %v1235 = vpop.permute.xlu0 %1234
        %1238 = vset.pattern.permute.xlu0 0
        %1239 = vperm.xlu0 %1238, %v1229
        %v1240 = vpop.permute.xlu0 %1239
        %1243 = vset.pattern.permute.xlu0 0
        %1244 = vperm.xlu0 %1243, %v1230
        %v1245 = vpop.permute.xlu0 %1244
        %1248 = vset.pattern.permute.xlu0 0
        %1249 = vperm.xlu0 %1248, %v1231
        %v1250 = vpop.permute.xlu0 %1249
        %v1256 = vunpack.c.l.b16 %v1222
        %v1257 = vunpack.c.l.b16 %v1223
        %v1258 = vunpack.c.l.b16 %v1224
        %v1259 = vunpack.c.l.b16 %v1225
        %v1260 = vpack.c.b16 %v1257, %v1256
        %v1261 = vpack.c.b16 %v1259, %v1258
        %v1263 = vsel %vm642, %v1260, 0
        %v1266 = vsel %vm642, %v1261, 0
        %1268 = vmatprep.subr.bf16.mxu0 0
        %1269 = vmatpush1.bf16.msra.mxu0 %v1226
        %1270 = vmatprep.subr.bf16.mxu0 0
        %1271 = vmatpush1.bf16.msra.mxu0 %v1227
        %1272 = vmatprep.subr.bf16.mxu0 0
        %1273 = vmatpush1.bf16.msra.mxu0 0
        %1274 = vmatprep.subr.bf16.mxu0 0
        %1275 = vmatpush1.bf16.msra.mxu0 0
        %1276 = vmatprep.subr.bf16.mxu0 0
        %1277 = vmatpush1.bf16.msra.mxu0 0
        %1278 = vmatprep.subr.bf16.mxu0 0
        %1279 = vmatpush1.bf16.msra.mxu0 0
        %1280 = vmatprep.subr.bf16.mxu0 0
        %1281 = vmatpush1.bf16.msra.mxu0 0
        %1282 = vmatprep.subr.bf16.mxu0 0
        %1283 = vmatpush1.bf16.msra.mxu0 0
        %1284 = vmatprep.subr.bf16.mxu0 0
        %1285 = vmatpush1.bf16.msra.mxu0 0
        %1286 = vmatprep.subr.bf16.mxu0 0
        %1287 = vmatpush1.bf16.msra.mxu0 0
        %1288 = vmatprep.subr.bf16.mxu0 0
        %1289 = vmatpush1.bf16.msra.mxu0 0
        %1290 = vmatprep.subr.bf16.mxu0 0
        %1291 = vmatpush1.bf16.msra.mxu0 0
        %1292 = vmatprep.subr.bf16.mxu0 0
        %1293 = vmatpush1.bf16.msra.mxu0 0
        %1294 = vmatprep.subr.bf16.mxu0 0
        %1295 = vmatpush1.bf16.msra.mxu0 0
        %1296 = vmatprep.subr.bf16.mxu0 0
        %1297 = vmatpush1.bf16.msra.mxu0 0
        %1298 = vmatprep.subr.bf16.mxu0 0
        %1299 = vmatpush1.bf16.msra.mxu0 0
        %1300 = vmatprep.mubr.bf16.mxu0 0
        %1301 = vmatmul.mubr.bf16.gmra.mrb[0].mxu0 %v1263
        %v1302 = vpop.f32.mrb[0].mxu0
        %v1303 = vadd.f32 %v1235, %v1302
        %v1304 = vpop.f32.mrb[0].mxu0
        %v1305 = vpop.f32.mrb[0].mxu0
        %v1306 = vadd.f32 %v1240, %v1305
        %v1307 = vpop.f32.mrb[0].mxu0
        %1308 = vmatprep.mubr.bf16.mxu0 0
        %1309 = vmatmul.mubr.bf16.gmra.mrb[0].mxu0 %v1266
        %v1310 = vpop.f32.mrb[0].mxu0
        %v1311 = vadd.f32 %v1245, %v1310
        %v1312 = vpop.f32.mrb[0].mxu0
        %v1313 = vpop.f32.mrb[0].mxu0
        %v1314 = vadd.f32 %v1250, %v1313
        %v1315 = vpop.f32.mrb[0].mxu0
        %1316 = vdwg.mxu0
        %v1317 = vmax.f32 %v1303, 0.0
        %v1318 = vmax.f32 %v1306, 0.0
        %v1319 = vmax.f32 %v1311, 0.0
        %v1320 = vmax.f32 %v1314, 0.0
        %v1321 = vld [vmem:[%s8 + $0x20] sm:$0xf]
        %v1322 = vld [vmem:[%s8 + $0x24] sm:$0xf]
        %v1323 = vld [vmem:[%s8 + $0x28] sm:$0xf]
        %v1324 = vld [vmem:[%s8 + $0x2c] sm:$0xf]
        %v1325 = vpack.c.bf16 %v1318, %v1317
        %v1326 = vpack.c.bf16 %v1320, %v1319
        %v1327 = vld [vmem:[%s9 + $0x40] sm:$0xff]
        %v1328 = vld [vmem:[%s9 + $0x48] sm:$0xff]
        %v1329 = vld [vmem:[%s9 + $0x50] sm:$0xff]
        %v1330 = vld [vmem:[%s9 + $0x58] sm:$0xff]
        %1332 = vset.pattern.permute.xlu0 0
        %1333 = vperm.xlu0 %1332, %v1327
        %v1334 = vpop.permute.xlu0 %1333
        %1337 = vset.pattern.permute.xlu0 0
        %1338 = vperm.xlu0 %1337, %v1328
        %v1339 = vpop.permute.xlu0 %1338
        %1342 = vset.pattern.permute.xlu0 0
        %1343 = vperm.xlu0 %1342, %v1329
        %v1344 = vpop.permute.xlu0 %1343
        %1347 = vset.pattern.permute.xlu0 0
        %1348 = vperm.xlu0 %1347, %v1330
        %v1349 = vpop.permute.xlu0 %1348
        %v1355 = vunpack.c.l.b16 %v1321
        %v1356 = vunpack.c.l.b16 %v1322
        %v1357 = vunpack.c.l.b16 %v1323
        %v1358 = vunpack.c.l.b16 %v1324
        %v1359 = vpack.c.b16 %v1356, %v1355
        %v1360 = vpack.c.b16 %v1358, %v1357
        %v1362 = vsel %vm642, %v1359, 0
        %v1365 = vsel %vm642, %v1360, 0
        %1367 = vmatprep.subr.bf16.mxu0 0
        %1368 = vmatpush1.bf16.msra.mxu0 %v1325
        %1369 = vmatprep.subr.bf16.mxu0 0
        %1370 = vmatpush1.bf16.msra.mxu0 %v1326
        %1371 = vmatprep.subr.bf16.mxu0 0
        %1372 = vmatpush1.bf16.msra.mxu0 0
        %1373 = vmatprep.subr.bf16.mxu0 0
        %1374 = vmatpush1.bf16.msra.mxu0 0
        %1375 = vmatprep.subr.bf16.mxu0 0
        %1376 = vmatpush1.bf16.msra.mxu0 0
        %1377 = vmatprep.subr.bf16.mxu0 0
        %1378 = vmatpush1.bf16.msra.mxu0 0
        %1379 = vmatprep.subr.bf16.mxu0 0
        %1380 = vmatpush1.bf16.msra.mxu0 0
        %1381 = vmatprep.subr.bf16.mxu0 0
        %1382 = vmatpush1.bf16.msra.mxu0 0
        %1383 = vmatprep.subr.bf16.mxu0 0
        %1384 = vmatpush1.bf16.msra.mxu0 0
        %1385 = vmatprep.subr.bf16.mxu0 0
        %1386 = vmatpush1.bf16.msra.mxu0 0
        %1387 = vmatprep.subr.bf16.mxu0 0
        %1388 = vmatpush1.bf16.msra.mxu0 0
        %1389 = vmatprep.subr.bf16.mxu0 0
        %1390 = vmatpush1.bf16.msra.mxu0 0
        %1391 = vmatprep.subr.bf16.mxu0 0
        %1392 = vmatpush1.bf16.msra.mxu0 0
        %1393 = vmatprep.subr.bf16.mxu0 0
        %1394 = vmatpush1.bf16.msra.mxu0 0
        %1395 = vmatprep.subr.bf16.mxu0 0
        %1396 = vmatpush1.bf16.msra.mxu0 0
        %1397 = vmatprep.subr.bf16.mxu0 0
        %1398 = vmatpush1.bf16.msra.mxu0 0
        %1399 = vmatprep.mubr.bf16.mxu0 0
        %1400 = vmatmul.mubr.bf16.gmra.mrb[0].mxu0 %v1362
        %v1401 = vpop.f32.mrb[0].mxu0
        %v1402 = vadd.f32 %v1334, %v1401
        %v1403 = vpop.f32.mrb[0].mxu0
        %v1404 = vpop.f32.mrb[0].mxu0
        %v1405 = vadd.f32 %v1339, %v1404
        %v1406 = vpop.f32.mrb[0].mxu0
        %1407 = vmatprep.mubr.bf16.mxu0 0
        %1408 = vmatmul.mubr.bf16.gmra.mrb[0].mxu0 %v1365
        %v1409 = vpop.f32.mrb[0].mxu0
        %v1410 = vadd.f32 %v1344, %v1409
        %v1411 = vpop.f32.mrb[0].mxu0
        %v1412 = vpop.f32.mrb[0].mxu0
        %v1413 = vadd.f32 %v1349, %v1412
        %v1414 = vpop.f32.mrb[0].mxu0
        %1415 = vdwg.mxu0
        %v1416 = vadd.f32 %v1214, %v1402
        %v1417 = vadd.f32 %v1215, %v1405
        %v1418 = vadd.f32 %v1216, %v1410
        %v1419 = vadd.f32 %v1217, %v1413
        %v1420 = vmax.f32 %v1416, 0.0
        %v1421 = vmax.f32 %v1417, 0.0
        %v1422 = vmax.f32 %v1418, 0.0
        %v1423 = vmax.f32 %v1419, 0.0
        %v1424 = vld [vmem:[%s10] sm:$0xf]
        %v1425 = vpack.c.bf16 %v1421, %v1420
        %v1426 = vpack.c.bf16 %v1423, %v1422
        %v1427 = vld [vmem:[%s11] sm:$0xff]
        %1429 = vset.pattern.permute.xlu0 0
        %1430 = vperm.xlu0 %1429, %v1427
        %v1431 = vpop.permute.xlu0 %1430
        %v1434 = vsel %vm642, %v1424, 0
        %1436 = vmatprep.subr.bf16.mxu0 0
        %1437 = vmatpush1.bf16.msra.mxu0 %v1425
        %1438 = vmatprep.subr.bf16.mxu0 0
        %1439 = vmatpush1.bf16.msra.mxu0 %v1426
        %1440 = vmatprep.subr.bf16.mxu0 0
        %1441 = vmatpush1.bf16.msra.mxu0 0
        %1442 = vmatprep.subr.bf16.mxu0 0
        %1443 = vmatpush1.bf16.msra.mxu0 0
        %1444 = vmatprep.subr.bf16.mxu0 0
        %1445 = vmatpush1.bf16.msra.mxu0 0
        %1446 = vmatprep.subr.bf16.mxu0 0
        %1447 = vmatpush1.bf16.msra.mxu0 0
        %1448 = vmatprep.subr.bf16.mxu0 0
        %1449 = vmatpush1.bf16.msra.mxu0 0
        %1450 = vmatprep.subr.bf16.mxu0 0
        %1451 = vmatpush1.bf16.msra.mxu0 0
        %1452 = vmatprep.subr.bf16.mxu0 0
        %1453 = vmatpush1.bf16.msra.mxu0 0
        %1454 = vmatprep.subr.bf16.mxu0 0
        %1455 = vmatpush1.bf16.msra.mxu0 0
        %1456 = vmatprep.subr.bf16.mxu0 0
        %1457 = vmatpush1.bf16.msra.mxu0 0
        %1458 = vmatprep.subr.bf16.mxu0 0
        %1459 = vmatpush1.bf16.msra.mxu0 0
        %1460 = vmatprep.subr.bf16.mxu0 0
        %1461 = vmatpush1.bf16.msra.mxu0 0
        %1462 = vmatprep.subr.bf16.mxu0 0
        %1463 = vmatpush1.bf16.msra.mxu0 0
        %1464 = vmatprep.subr.bf16.mxu0 0
        %1465 = vmatpush1.bf16.msra.mxu0 0
        %1466 = vmatprep.subr.bf16.mxu0 0
        %1467 = vmatpush1.bf16.msra.mxu0 0
        %1468 = vmatprep.mubr.bf16.mxu0 0
        %1469 = vmatmul.mubr.bf16.gmra.mrb[0].mxu0 %v1434
        %v1470 = vpop.f32.mrb[0].mxu0
        %v1471 = vadd.f32 %v1431, %v1470
        %v1472 = vpop.f32.mrb[0].mxu0
        %v1473 = vpop.f32.mrb[0].mxu0
        %v1474 = vpop.f32.mrb[0].mxu0
        %1475 = vdwg.mxu0
        %vm1476 = vcmask 523264
        %1477 = vst.msk [vmem:[%s441] sm:$0xff] %vm1476, %v1471
        %s1478 = sand.u32 %s312, 1
        %s1479 = scalar_lea.sflag [#allocation3], %s1478
        %s1480 = sand.u32 %s312, 1
        %s1481 = smul.addr %s1480, 8
        %s1482 = scalar_lea.vmem [#allocation2], %s1481
        // Predicated region
        $region69: #{tpu_custom_call.1} parent=67 // pred_check
          %p1483 = pneg %p322
        $region70: #{tpu_custom_call.1} parent=67 // pred_check_branch
          %1485 = sbr.rel (%p1483) target = $region72
        $region71: #{tpu_custom_call.1} parent=67 // pred_region
          %s1487 = ssub.s32 128, 128
          %1488 = vsyncadd %s1479, %s1487
          %s1489 = sadd.s32 %s31, %s30
          %s1490 = smul.addr %s1489, 128
          %s1491 = scalar_lea.hbm %s12, %s1490
          %s1493 = sshll.u32 %s1482, 4
          %s1494 = int_to_ptr.vmem [resolvable:$true] %s1493
          %1496 = dma.vmem_to_hbm [thread:$0]  %s1494, 128, %s1491, %s1479
        $region72: #{tpu_custom_call.1} parent=67 // pred_fallthru
          _
      $region68: #{tpu_custom_call.1} parent=5 // pred_fallthru
        _
      %p1497 = scmp.le.s32.totalorder 2, %s21
      // Predicated region
      $region73: #{tpu_custom_call.1} parent=5 // pred_check
        %p1498 = pneg %p1497
      $region74: #{tpu_custom_call.1} parent=5 // pred_check_branch
        %1500 = sbr.rel (%p1498) target = $region76
      $region75: #{tpu_custom_call.1} parent=5 // pred_region
        %s1501 = ssub.s32 %s21, 2
        // Predicated region
        $region77: #{tpu_custom_call.1} parent=75 // pred_check
          %p1502 = pneg %p328
        $region78: #{tpu_custom_call.1} parent=75 // pred_check_branch
          %1504 = sbr.rel (%p1502) target = $region80
        $region79: #{tpu_custom_call.1} parent=75 // pred_region
          %s1505 = sand.u32 %s313, 1
          %s1506 = scalar_lea.sflag [#allocation3], %s1505
          %s1507 = sand.u32 %s313, 1
          %s1508 = smul.addr %s1507, 8
          %s1509 = scalar_lea.vmem [#allocation2], %s1508
          %1510 = dma.done %s1506, 128
        $region80: #{tpu_custom_call.1} parent=75 // pred_fallthru
          _
      $region76: #{tpu_custom_call.1} parent=5 // pred_fallthru
        _
    $region6: #{tpu_custom_call.1} parent=1 // loop_footer
      %s25 = sadd.s32 1, %s21
    $region7: #{tpu_custom_call.1} parent=1 // loop_footer_branch
      %20 = sbr.rel target = $region3
    $region8: #{tpu_custom_call.1} parent=1 // loop_exit
      _
    %1511 = vsyncpa [#allocation3], 1
    %s1512 = scalar_lea.sflag [#allocation3], 1
    %1513 = vsyncpa %s1512, 1

</llo_original>
